<compile_context>
chip_gen: v7x
topology: tpu7x:2x2x1
jax: 0.10.0
libtpu: 0.0.40
codegen_flags: <defaults>
</compile_context>

<pallas_src>
import jax
import jax.numpy as jnp
from jax.experimental import pallas as pl
from jax.experimental.pallas import tpu as pltpu


# ---------------------------------------------------------------------------
# Fused forward builder (all architecture config is static / closed over)
# ---------------------------------------------------------------------------

def make_ssl_encoder_forward(*, input_size, num_channels, kernel_size,
                             output_size, n_hid,
                             compute_dtype=jnp.bfloat16):
    """Returns forward(params, actions, actors, target_idx).

    compute_dtype: dtype of MXU operands (accumulation is always f32).
      bf16 is native on v5e/v6e/v7x; pass jnp.float32 for reference-exact math.
    """
    K = kernel_size
    LANE = 128
    CIN0_PAD = ((input_size + LANE - 1) // LANE) * LANE   # 102 -> 128
    COL = max(max(num_channels), output_size, n_hid)       # packed-slab width
    cd = compute_dtype

    # Static per-block geometry.
    blocks_cfg = []
    cin, cin_p = input_size, CIN0_PAD
    for i, cout in enumerate(num_channels):
        blocks_cfg.append(dict(cin=cin, cin_p=cin_p, cout=cout, d=2 ** i,
                               has_ds=(cin != cout)))
        cin, cin_p = cout, cout
    C_last = num_channels[-1]
    n_blocks = len(blocks_cfg)

    # Static row layout of the packed weight slab (Python ints only).
    woff = {}
    off = 0
    for bi, bc in enumerate(blocks_cfg):
        woff[(bi, "w1")] = off; off += K * bc["cin_p"]
        woff[(bi, "w2")] = off; off += K * bc["cout"]
        if bc["has_ds"]:
            woff[(bi, "ds")] = off; off += bc["cin_p"]
    woff["lin"] = off; off += C_last
    woff["top"] = off; off += output_size
    woff["bot"] = off; off += output_size
    woff["aux"] = off; off += n_hid

    def forward(params, actions, actors, target_idx):
        N, T, _ = actions.shape          # N = 2*B (original ++ augmented)
        B = N // 2
        NT = N * T

        # -------------------------------------------------------------------
        # Pack operands (3 DMAs total instead of ~23)
        # -------------------------------------------------------------------
        def pad2(a, rows, cols):
            return jnp.pad(a, ((0, rows - a.shape[0]), (0, cols - a.shape[1])))

        # (1) all matmul weights -> one bf16 slab, tap-fused per conv
        parts = []
        for blk, bc in zip(params["blocks"], blocks_cfg):
            cin_p, cout = bc["cin_p"], bc["cout"]
            w1 = blk["w1"]                                     # (K, cin, cout)
            parts.append(jnp.pad(
                w1, ((0, 0), (0, cin_p - w1.shape[1]), (0, COL - cout))
            ).reshape(K * cin_p, COL))
            w2 = blk["w2"]                                     # (K, cout, cout)
            parts.append(jnp.pad(
                w2, ((0, 0), (0, 0), (0, COL - cout))).reshape(K * cout, COL))
            if bc["has_ds"]:
                parts.append(pad2(blk["w_ds"], cin_p, COL))
        parts.append(pad2(params["w_lin"], C_last, COL))
        parts.append(pad2(params["w_top"], output_size, COL))
        parts.append(pad2(params["w_bot"], output_size, COL))
        parts.append(pad2(params["w_aux"], n_hid, COL))
        wb = jnp.concatenate(parts, axis=0).astype(cd)         # (W_ROWS, COL)

        # (2) target actor features + all biases -> one f32 slab
        tgt = actors[target_idx]                               # (B, output_size)
        tgt2 = jnp.concatenate([tgt, tgt], axis=0)             # (N, output_size)
        bias_list, bidx = [], {}

        def push_bias(key, vec):
            bidx[key] = N + len(bias_list)
            bias_list.append(jnp.pad(vec, ((0, 0), (0, COL - vec.shape[1]))))

        for bi, (blk, bc) in enumerate(zip(params["blocks"], blocks_cfg)):
            push_bias((bi, "b1"), blk["b1"])
            push_bias((bi, "b2"), blk["b2"])
            if bc["has_ds"]:
                push_bias((bi, "bds"), blk["b_ds"])
        push_bias("blin", params["b_lin"])
        push_bias("bout", params["b_out"])
        push_bias("baux", params["b_aux"])
        misc = jnp.concatenate(
            [jnp.pad(tgt2, ((0, 0), (0, COL - output_size)))] + bias_list,
            axis=0).astype(jnp.float32)                        # (N + n_bias, COL)

        # (3) input actions, lane-aligned channels, bf16
        x_in = jnp.pad(actions,
                       ((0, 0), (0, 0), (0, CIN0_PAD - input_size))).astype(cd)

        # -------------------------------------------------------------------
        # Fused kernel
        # -------------------------------------------------------------------
        def kernel(x_ref, wb_ref, misc_ref, out_ref):
            f32 = jnp.float32

            def wts(roff, nrows, ncols):
                return wb_ref[roff:roff + nrows, :ncols]       # bf16 (nrows, ncols)

            def bias(key, ncols):
                r0 = bidx[key]
                return misc_ref[r0:r0 + 1, :ncols]             # f32 (1, ncols)

            def causal_conv_full(h, bi, which, d, cin_p, cout):
                """Full-T causal dilated conv: K taps fused into ONE matmul."""
                p = (K - 1) * d
                hp = h if p == 0 else jnp.concatenate(
                    [jnp.zeros((N, p, cin_p), h.dtype), h], axis=1)
                taps = [hp[:, k * d:k * d + T, :] for k in range(K)]
                slab = taps[0] if K == 1 else jnp.concatenate(taps, axis=-1)
                acc = jnp.dot(slab.reshape(NT, K * cin_p),
                              wts(woff[(bi, which)], K * cin_p, cout),
                              preferred_element_type=f32)
                b = bias((bi, "b1" if which == "w1" else "b2"), cout)
                return jnp.maximum(acc + b, 0.0)               # (NT, cout) f32

            h = x_ref[...]                                     # (N, T, CIN0_PAD) cd
            feat = None
            for bi, bc in enumerate(blocks_cfg):
                cin_p, cout, d = bc["cin_p"], bc["cout"], bc["d"]
                has_ds = bc["has_ds"]
                if bi < n_blocks - 1:
                    # conv1 -> chomp -> relu ; conv2 -> chomp -> relu ; relu(+res)
                    h1 = causal_conv_full(h, bi, "w1", d, cin_p, cout)
                    h1 = h1.astype(cd).reshape(N, T, cout)
                    h2 = causal_conv_full(h1, bi, "w2", d, cout, cout)
                    if has_ds:
                        res = (jnp.dot(h.reshape(NT, cin_p),
                                       wts(woff[(bi, "ds")], cin_p, cout),
                                       preferred_element_type=f32)
                               + bias((bi, "bds"), cout))
                    else:
                        res = h.reshape(NT, cin_p)[:, :cout].astype(f32)
                    h = jnp.maximum(h2 + res, 0.0).astype(cd).reshape(N, T, cout)
                else:
                    # Last block: only t = T-1 is consumed downstream, so
                    # evaluate conv1 only at the K timesteps conv2@(T-1) reads.
                    t_need = [T - 1 - (K - 1 - k) * d for k in range(K)]
                    valid = [t for t in t_need if t >= 0]
                    rows = []
                    for t in valid:
                        ps = []
                        for j in range(K):
                            tj = t - (K - 1 - j) * d
                            ps.append(h[:, tj, :] if tj >= 0
                                      else jnp.zeros((N, cin_p), h.dtype))
                        rows.append(ps[0] if K == 1
                                    else jnp.concatenate(ps, axis=-1))
                    lhs1 = rows[0] if len(rows) == 1 else jnp.concatenate(rows, axis=0)
                    h1v = jnp.dot(lhs1, wts(woff[(bi, "w1")], K * cin_p, cout),
                                  preferred_element_type=f32)
                    h1v = jnp.maximum(h1v + bias((bi, "b1"), cout), 0.0).astype(cd)

                    ps2 = []
                    for k in range(K):
                        t = t_need[k]
                        if t >= 0:
                            i0 = valid.index(t) * N
                            ps2.append(h1v[i0:i0 + N, :])
                        else:
                            ps2.append(jnp.zeros((N, cout), cd))
                    lhs2 = ps2[0] if K == 1 else jnp.concatenate(ps2, axis=-1)
                    out2 = jnp.dot(lhs2, wts(woff[(bi, "w2")], K * cout, cout),
                                   preferred_element_type=f32)
                    out2 = jnp.maximum(out2 + bias((bi, "b2"), cout), 0.0)

                    h_last = h[:, T - 1, :]                    # (N, cin_p) cd
                    if has_ds:
                        res_l = (jnp.dot(h_last, wts(woff[(bi, "ds")], cin_p, cout),
                                         preferred_element_type=f32)
                                 + bias((bi, "bds"), cout))
                    else:
                        res_l = h_last[:, :cout].astype(f32)
                    feat = jnp.maximum(out2 + res_l, 0.0).astype(cd)   # (N, C_last)

            # TCN head: Linear + Sigmoid on last-timestep features (f32 math).
            emb_pre = (jnp.dot(feat, wts(woff["lin"], C_last, output_size),
                               preferred_element_type=f32)
                       + bias("blin", output_size))
            emb = (1.0 / (1.0 + jnp.exp(-emb_pre))).astype(cd)         # (N, OS)

            # SSL head: concat([emb, target]) @ W_out == two row-sliced matmuls.
            tgt_v = misc_ref[0:N, :output_size].astype(cd)
            pre = (jnp.dot(emb, wts(woff["top"], output_size, n_hid),
                           preferred_element_type=f32)
                   + jnp.dot(tgt_v, wts(woff["bot"], output_size, n_hid),
                             preferred_element_type=f32)
                   + bias("bout", n_hid))
            hid_tmp = jnp.tanh(pre)                                    # (N, n_hid)
            aux = (jnp.dot(hid_tmp.astype(cd), wts(woff["aux"], n_hid, n_hid),
                           preferred_element_type=f32)
                   + bias("baux", n_hid))

            # Single lane-denser output store: [hid | aux].
            out_ref[...] = jnp.concatenate([hid_tmp, aux],
                                           axis=-1).astype(out_ref.dtype)

        # -------------------------------------------------------------------
        # pallas_call: one program, everything whole-array in VMEM
        # -------------------------------------------------------------------
        def full_spec(a):
            zeros = (0,) * a.ndim
            return pl.BlockSpec(a.shape, lambda i: zeros)

        inputs = [x_in, wb, misc]
        out = pl.pallas_call(
            kernel,
            out_shape=jax.ShapeDtypeStruct((N, 2 * n_hid), jnp.float32),
            grid=(1,),
            in_specs=[full_spec(a) for a in inputs],
            out_specs=pl.BlockSpec((N, 2 * n_hid), lambda i: (0, 0)),
            compiler_params=pltpu.CompilerParams(
                dimension_semantics=("arbitrary",)),
        )(*inputs)

        hid_tmp = out[:, :n_hid]
        hid_aux = out[:, n_hid:]
        # Kernel rows follow `actions` order = [original (anchor), augmented
        # (positive)].  PyTorch returns [positive, anchor] for hid and hid_aux.
        hid = [hid_tmp[B:], hid_tmp[:B]]
        hid_aux_out = [hid_aux[B:], hid_aux[:B]]
        return [hid, hid_aux_out]

    return forward


# ---------------------------------------------------------------------------
# Pure-JAX reference (for correctness check only)
# ---------------------------------------------------------------------------

def ssl_reference(params, actions, actors, target_idx, *, num_channels, kernel_size):
    K = kernel_size
    N, T, _ = actions.shape
    B = N // 2
    prec = jax.lax.Precision.HIGHEST
    h = actions
    for i, blk in enumerate(params["blocks"]):
        d = 2 ** i
        p = (K - 1) * d

        def conv(x, w, b):
            xp = jnp.pad(x, ((0, 0), (p, 0), (0, 0)))
            out = b
            for k in range(K):
                out = out + jnp.einsum("ntc,cf->ntf", xp[:, k * d:k * d + T, :],
                                       w[k], precision=prec)
            return out

        h1 = jax.nn.relu(conv(h, blk["w1"], blk["b1"]))
        h2 = jax.nn.relu(conv(h1, blk["w2"], blk["b2"]))
        if blk["w_ds"] is not None:
            res = jnp.einsum("ntc,cf->ntf", h, blk["w_ds"], precision=prec) + blk["b_ds"]
        else:
            res = h
        h = jax.nn.relu(h2 + res)

    feat = h[:, -1, :]
    emb = jax.nn.sigmoid(jnp.dot(feat, params["w_lin"], precision=prec) + params["b_lin"])
    tgt = actors[target_idx]
    sample_orig = jnp.concatenate([emb[:B], tgt], axis=1)
    sample_aug = jnp.concatenate([emb[B:], tgt], axis=1)
    samples = jnp.concatenate([sample_aug, sample_orig], axis=0)
    w_out = jnp.concatenate([params["w_top"], params["w_bot"]], axis=0)
    hid_tmp = jnp.tanh(jnp.dot(samples, w_out, precision=prec) + params["b_out"])
    aux = jnp.dot(hid_tmp, params["w_aux"], precision=prec) + params["b_aux"]
    return [[hid_tmp[:B], hid_tmp[B:]], [aux[:B], aux[B:]]]


# ---------------------------------------------------------------------------
# Deterministic parameter construction (arrays only — jit-safe pytree)
# ---------------------------------------------------------------------------

def make_weight_norm_conv(key, cin, cout, K):
    """weight_norm(nn.Conv1d): w = g * v / ||v||_(Cin,K) per out channel."""
    k1, k2, k3 = jax.random.split(key, 3)
    v = 0.1 * jax.random.normal(k1, (cout, cin, K), jnp.float32)
    g = 1.0 + 0.1 * jax.random.normal(k2, (cout,), jnp.float32)
    norm = jnp.sqrt(jnp.sum(v * v, axis=(1, 2), keepdims=True)) + 1e-8
    w = g[:, None, None] * v / norm                       # (Cout, Cin, K) torch layout
    b = 0.1 * jax.random.normal(k3, (cout,), jnp.float32)
    return jnp.transpose(w, (2, 1, 0)), b.reshape(1, cout)   # (K, Cin, Cout), (1, Cout)


def make_conv1x1(key, cin, cout):
    """Plain nn.Conv1d(cin, cout, 1) downsample (no weight norm)."""
    k1, k2 = jax.random.split(key)
    w = 0.1 * jax.random.normal(k1, (cout, cin), jnp.float32)
    b = 0.1 * jax.random.normal(k2, (cout,), jnp.float32)
    return jnp.transpose(w), b.reshape(1, cout)              # (Cin, Cout), (1, Cout)


def make_linear(key, fin, fout):
    k1, k2 = jax.random.split(key)
    w = 0.1 * jax.random.normal(k1, (fout, fin), jnp.float32)
    b = 0.1 * jax.random.normal(k2, (fout,), jnp.float32)
    return jnp.transpose(w), b.reshape(1, fout)              # (Fin, Fout), (1, Fout)


def build_params(key, *, input_size, num_channels, kernel_size, output_size, n_hid):
    n_blocks = len(num_channels)
    keys = jax.random.split(key, 3 * n_blocks + 3)
    ki = iter(keys)

    blocks = []
    cin = input_size
    for cout in num_channels:
        w1, b1 = make_weight_norm_conv(next(ki), cin, cout, kernel_size)
        w2, b2 = make_weight_norm_conv(next(ki), cout, cout, kernel_size)
        if cin != cout:
            w_ds, b_ds = make_conv1x1(next(ki), cin, cout)
        else:
            _ = next(ki)
            w_ds, b_ds = None, None
        blocks.append(dict(w1=w1, b1=b1, w2=w2, b2=b2, w_ds=w_ds, b_ds=b_ds))
        cin = cout

    w_lin, b_lin = make_linear(next(ki), num_channels[-1], output_size)
    w_out, b_out = make_linear(next(ki), output_size * 2, n_hid)
    w_aux, b_aux = make_linear(next(ki), n_hid, n_hid)

    return dict(blocks=blocks, w_lin=w_lin, b_lin=b_lin,
                w_top=w_out[:output_size], w_bot=w_out[output_size:],
                b_out=b_out, w_aux=w_aux, b_aux=b_aux)


# ---------------------------------------------------------------------------
# Main
# ---------------------------------------------------------------------------

if __name__ == "__main__":
    key = jax.random.PRNGKey(0)

    # config_action_emb / config_enc are empty in the source -> chosen here
    input_size = 102                 # fixed by the module
    num_channels = [32, 32]
    kernel_size = 3
    output_size = 16                 # config_action_emb['output_size']
    n_hid = 24                       # config_action_emb['n_hid']

    B = 2                            # batch_num
    T = 16                           # action sequence length
    num_aug = 4                      # number of augmented action variants
    veh_in_batch = [3, 3]
    veh_num = sum(veh_in_batch)
    target_idx = jnp.array(
        [1] + [sum(veh_in_batch[:i + 1]) + 1 for i in range(B - 1)], jnp.int32)

    k_par, k_act, k_actors = jax.random.split(key, 3)
    params = build_params(k_par, input_size=input_size, num_channels=num_channels,
                          kernel_size=kernel_size, output_size=output_size, n_hid=n_hid)

    # data['action'][i] ~ (1, num_aug, T, 102)
    action_keys = jax.random.split(k_act, B)
    data_action = [jax.random.normal(action_keys[i], (1, num_aug, T, input_size),
                                     jnp.float32) for i in range(B)]
    # deterministic stand-in for np.random.randint(1, num_aug)
    positive_idx = [(i % (num_aug - 1)) + 1 for i in range(B)]

    action_original = jnp.concatenate(
        [data_action[i][0:1, 0, :, :] for i in range(B)], axis=0)
    action_augmented = jnp.concatenate(
        [data_action[i][0:1, positive_idx[i], :, :] for i in range(B)], axis=0)
    actions = jnp.concatenate([action_original, action_augmented], axis=0)  # (2B,T,102)

    # TODO(synk): synthetic stand-in for base_model.Net(config) output
    actors = jax.random.normal(k_actors, (veh_num, output_size), jnp.float32)

    fwd = jax.jit(make_ssl_encoder_forward(
        input_size=input_size, num_channels=num_channels, kernel_size=kernel_size,
        output_size=output_size, n_hid=n_hid, compute_dtype=jnp.bfloat16))

    out = fwd(params, actions, actors, target_idx)
    jax.block_until_ready(out)

    # Correctness check against a pure-JAX f32 reference of the same math.
    ref = ssl_reference(params, actions, actors, target_idx,
                        num_channels=num_channels, kernel_size=kernel_size)

    (hid_pos, hid_anc), (aux_pos, aux_anc) = out[0], out[1]
    assert hid_pos.shape == (B, n_hid) and hid_anc.shape == (B, n_hid)
    assert aux_pos.shape == (B, n_hid) and aux_anc.shape == (B, n_hid)

    max_err = 0.0
    for got, want in zip([hid_pos, hid_anc, aux_pos, aux_anc],
                         [ref[0][0], ref[0][1], ref[1][0], ref[1][1]]):
        assert got.shape == want.shape
        assert bool(jnp.all(jnp.isfinite(got)))
        max_err = max(max_err, float(jnp.max(jnp.abs(got - want))))
    # bf16 MXU operands (f32 accumulation) vs f32 reference -> loose tolerance
    assert max_err < 5e-2, f"Pallas kernel mismatch vs JAX reference: max|err|={max_err}"

    print("KERNEL_OK")
</pallas_src>

<mosaic_0001>
module attributes {stable_mosaic.version = 11 : i64} {
  func.func @kernel(%arg0: i32, %arg1: memref<4x16x128xbf16, #tpu.memory_space<vmem>>, %arg2: memref<888x32xbf16, #tpu.memory_space<vmem>>, %arg3: memref<12x32xf32, #tpu.memory_space<vmem>>, %arg4: memref<4x48xf32, #tpu.memory_space<vmem>>) attributes {dimension_semantics = [#tpu.dimension_semantics<arbitrary>], iteration_bounds = array<i64: 1>, scalar_prefetch = 0 : i64, scratch_operands = 0 : i64, tpu.core_type = #tpu.core_type<tc>, window_params = [{pipeline_mode = #tpu.pipeline_mode<synchronous>, transform_indices = @transform_0, window_bounds = array<i64: 4, 16, 128>}, {pipeline_mode = #tpu.pipeline_mode<synchronous>, transform_indices = @transform_1, window_bounds = array<i64: 888, 32>}, {pipeline_mode = #tpu.pipeline_mode<synchronous>, transform_indices = @transform_2, window_bounds = array<i64: 12, 32>}, {pipeline_mode = #tpu.pipeline_mode<synchronous>, transform_indices = @transform_3, window_bounds = array<i64: 4, 48>}]} {
    %c0 = arith.constant 0 : index
    %c0_0 = arith.constant 0 : index
    %c0_1 = arith.constant 0 : index
    %0 = vector.load %arg1[%c0, %c0_0, %c0_1] : memref<4x16x128xbf16, #tpu.memory_space<vmem>>, vector<4x16x128xbf16>
    %cst = arith.constant 0.000000e+00 : bf16
    %1 = vector.broadcast %cst : bf16 to vector<4x2x128xbf16>
    %2 = tpu.concatenate %1, %0 in 1 : vector<4x2x128xbf16>, vector<4x16x128xbf16> -> vector<4x18x128xbf16>
    %3 = vector.extract_strided_slice %2 {offsets = [0, 0, 0], sizes = [4, 16, 128], strides = [1, 1, 1]} : vector<4x18x128xbf16> to vector<4x16x128xbf16>
    %4 = vector.extract_strided_slice %2 {offsets = [0, 1, 0], sizes = [4, 16, 128], strides = [1, 1, 1]} : vector<4x18x128xbf16> to vector<4x16x128xbf16>
    %5 = vector.extract_strided_slice %2 {offsets = [0, 2, 0], sizes = [4, 16, 128], strides = [1, 1, 1]} : vector<4x18x128xbf16> to vector<4x16x128xbf16>
    %6 = tpu.concatenate %3, %4, %5 in 2 : vector<4x16x128xbf16>, vector<4x16x128xbf16>, vector<4x16x128xbf16> -> vector<4x16x384xbf16>
    %7 = vector.shape_cast %6 : vector<4x16x384xbf16> to vector<64x384xbf16>
    %c0_2 = arith.constant 0 : index
    %c0_3 = arith.constant 0 : index
    %8 = vector.load %arg2[%c0_2, %c0_3] : memref<888x32xbf16, #tpu.memory_space<vmem>>, vector<384x32xbf16>
    %cst_4 = arith.constant dense<0.000000e+00> : vector<64x32xf32>
    %9 = tpu.matmul %7, %8, %cst_4 {dimension_numbers = #tpu.dot_dimension_numbers<[1], [0], [0], [1], [0, 0, 1, 1], [], []>} : vector<64x384xbf16>, vector<384x32xbf16>, vector<64x32xf32> -> vector<64x32xf32>
    %c4 = arith.constant 4 : index
    %c0_5 = arith.constant 0 : index
    %10 = vector.load %arg3[%c4, %c0_5] : memref<12x32xf32, #tpu.memory_space<vmem>>, vector<1x32xf32>
    %11 = vector.broadcast %10 : vector<1x32xf32> to vector<64x32xf32>
    %12 = arith.addf %9, %11 : vector<64x32xf32>
    %cst_6 = arith.constant 0.000000e+00 : f32
    %13 = vector.broadcast %cst_6 : f32 to vector<64x32xf32>
    %14 = arith.maximumf %12, %13 : vector<64x32xf32>
    %15 = arith.truncf %14 : vector<64x32xf32> to vector<64x32xbf16>
    %16 = vector.shape_cast %15 : vector<64x32xbf16> to vector<4x16x32xbf16>
    %cst_7 = arith.constant 0.000000e+00 : bf16
    %17 = vector.broadcast %cst_7 : bf16 to vector<4x2x32xbf16>
    %18 = tpu.concatenate %17, %16 in 1 : vector<4x2x32xbf16>, vector<4x16x32xbf16> -> vector<4x18x32xbf16>
    %19 = vector.extract_strided_slice %18 {offsets = [0, 0, 0], sizes = [4, 16, 32], strides = [1, 1, 1]} : vector<4x18x32xbf16> to vector<4x16x32xbf16>
    %20 = vector.extract_strided_slice %18 {offsets = [0, 1, 0], sizes = [4, 16, 32], strides = [1, 1, 1]} : vector<4x18x32xbf16> to vector<4x16x32xbf16>
    %21 = vector.extract_strided_slice %18 {offsets = [0, 2, 0], sizes = [4, 16, 32], strides = [1, 1, 1]} : vector<4x18x32xbf16> to vector<4x16x32xbf16>
    %22 = tpu.concatenate %19, %20, %21 in 2 : vector<4x16x32xbf16>, vector<4x16x32xbf16>, vector<4x16x32xbf16> -> vector<4x16x96xbf16>
    %23 = vector.shape_cast %22 : vector<4x16x96xbf16> to vector<64x96xbf16>
    %c384 = arith.constant 384 : index
    %c0_8 = arith.constant 0 : index
    %24 = vector.load %arg2[%c384, %c0_8] : memref<888x32xbf16, #tpu.memory_space<vmem>>, vector<96x32xbf16>
    %cst_9 = arith.constant dense<0.000000e+00> : vector<64x32xf32>
    %25 = tpu.matmul %23, %24, %cst_9 {dimension_numbers = #tpu.dot_dimension_numbers<[1], [0], [0], [1], [0, 0, 1, 1], [], []>} : vector<64x96xbf16>, vector<96x32xbf16>, vector<64x32xf32> -> vector<64x32xf32>
    %c5 = arith.constant 5 : index
    %c0_10 = arith.constant 0 : index
    %26 = vector.load %arg3[%c5, %c0_10] : memref<12x32xf32, #tpu.memory_space<vmem>>, vector<1x32xf32>
    %27 = vector.broadcast %26 : vector<1x32xf32> to vector<64x32xf32>
    %28 = arith.addf %25, %27 : vector<64x32xf32>
    %cst_11 = arith.constant 0.000000e+00 : f32
    %29 = vector.broadcast %cst_11 : f32 to vector<64x32xf32>
    %30 = arith.maximumf %28, %29 : vector<64x32xf32>
    %31 = vector.shape_cast %0 : vector<4x16x128xbf16> to vector<64x128xbf16>
    %c480 = arith.constant 480 : index
    %c0_12 = arith.constant 0 : index
    %32 = vector.load %arg2[%c480, %c0_12] : memref<888x32xbf16, #tpu.memory_space<vmem>>, vector<128x32xbf16>
    %cst_13 = arith.constant dense<0.000000e+00> : vector<64x32xf32>
    %33 = tpu.matmul %31, %32, %cst_13 {dimension_numbers = #tpu.dot_dimension_numbers<[1], [0], [0], [1], [0, 0, 1, 1], [], []>} : vector<64x128xbf16>, vector<128x32xbf16>, vector<64x32xf32> -> vector<64x32xf32>
    %c6 = arith.constant 6 : index
    %c0_14 = arith.constant 0 : index
    %34 = vector.load %arg3[%c6, %c0_14] : memref<12x32xf32, #tpu.memory_space<vmem>>, vector<1x32xf32>
    %35 = vector.broadcast %34 : vector<1x32xf32> to vector<64x32xf32>
    %36 = arith.addf %33, %35 : vector<64x32xf32>
    %37 = arith.addf %30, %36 : vector<64x32xf32>
    %cst_15 = arith.constant 0.000000e+00 : f32
    %38 = vector.broadcast %cst_15 : f32 to vector<64x32xf32>
    %39 = arith.maximumf %37, %38 : vector<64x32xf32>
    %40 = arith.truncf %39 : vector<64x32xf32> to vector<64x32xbf16>
    %41 = vector.shape_cast %40 : vector<64x32xbf16> to vector<4x16x32xbf16>
    %42 = vector.extract_strided_slice %41 {offsets = [0, 7, 0], sizes = [4, 1, 32], strides = [1, 1, 1]} : vector<4x16x32xbf16> to vector<4x1x32xbf16>
    %43 = vector.shape_cast %42 : vector<4x1x32xbf16> to vector<4x32xbf16>
    %44 = vector.extract_strided_slice %41 {offsets = [0, 9, 0], sizes = [4, 1, 32], strides = [1, 1, 1]} : vector<4x16x32xbf16> to vector<4x1x32xbf16>
    %45 = vector.shape_cast %44 : vector<4x1x32xbf16> to vector<4x32xbf16>
    %46 = vector.extract_strided_slice %41 {offsets = [0, 11, 0], sizes = [4, 1, 32], strides = [1, 1, 1]} : vector<4x16x32xbf16> to vector<4x1x32xbf16>
    %47 = vector.shape_cast %46 : vector<4x1x32xbf16> to vector<4x32xbf16>
    %48 = tpu.concatenate %43, %45, %47 in 1 : vector<4x32xbf16>, vector<4x32xbf16>, vector<4x32xbf16> -> vector<4x96xbf16>
    %49 = vector.extract_strided_slice %41 {offsets = [0, 9, 0], sizes = [4, 1, 32], strides = [1, 1, 1]} : vector<4x16x32xbf16> to vector<4x1x32xbf16>
    %50 = vector.shape_cast %49 : vector<4x1x32xbf16> to vector<4x32xbf16>
    %51 = vector.extract_strided_slice %41 {offsets = [0, 11, 0], sizes = [4, 1, 32], strides = [1, 1, 1]} : vector<4x16x32xbf16> to vector<4x1x32xbf16>
    %52 = vector.shape_cast %51 : vector<4x1x32xbf16> to vector<4x32xbf16>
    %53 = vector.extract_strided_slice %41 {offsets = [0, 13, 0], sizes = [4, 1, 32], strides = [1, 1, 1]} : vector<4x16x32xbf16> to vector<4x1x32xbf16>
    %54 = vector.shape_cast %53 : vector<4x1x32xbf16> to vector<4x32xbf16>
    %55 = tpu.concatenate %50, %52, %54 in 1 : vector<4x32xbf16>, vector<4x32xbf16>, vector<4x32xbf16> -> vector<4x96xbf16>
    %56 = vector.extract_strided_slice %41 {offsets = [0, 11, 0], sizes = [4, 1, 32], strides = [1, 1, 1]} : vector<4x16x32xbf16> to vector<4x1x32xbf16>
    %57 = vector.shape_cast %56 : vector<4x1x32xbf16> to vector<4x32xbf16>
    %58 = vector.extract_strided_slice %41 {offsets = [0, 13, 0], sizes = [4, 1, 32], strides = [1, 1, 1]} : vector<4x16x32xbf16> to vector<4x1x32xbf16>
    %59 = vector.shape_cast %58 : vector<4x1x32xbf16> to vector<4x32xbf16>
    %60 = vector.extract_strided_slice %41 {offsets = [0, 15, 0], sizes = [4, 1, 32], strides = [1, 1, 1]} : vector<4x16x32xbf16> to vector<4x1x32xbf16>
    %61 = vector.shape_cast %60 : vector<4x1x32xbf16> to vector<4x32xbf16>
    %62 = tpu.concatenate %57, %59, %61 in 1 : vector<4x32xbf16>, vector<4x32xbf16>, vector<4x32xbf16> -> vector<4x96xbf16>
    %63 = tpu.concatenate %48, %55, %62 in 0 : vector<4x96xbf16>, vector<4x96xbf16>, vector<4x96xbf16> -> vector<12x96xbf16>
    %c608 = arith.constant 608 : index
    %c0_16 = arith.constant 0 : index
    %64 = vector.load %arg2[%c608, %c0_16] : memref<888x32xbf16, #tpu.memory_space<vmem>>, vector<96x32xbf16>
    %cst_17 = arith.constant dense<0.000000e+00> : vector<12x32xf32>
    %65 = tpu.matmul %63, %64, %cst_17 {dimension_numbers = #tpu.dot_dimension_numbers<[1], [0], [0], [1], [0, 0, 1, 1], [], []>} : vector<12x96xbf16>, vector<96x32xbf16>, vector<12x32xf32> -> vector<12x32xf32>
    %c7 = arith.constant 7 : index
    %c0_18 = arith.constant 0 : index
    %66 = vector.load %arg3[%c7, %c0_18] : memref<12x32xf32, #tpu.memory_space<vmem>>, vector<1x32xf32>
    %67 = vector.broadcast %66 : vector<1x32xf32> to vector<12x32xf32>
    %68 = arith.addf %65, %67 : vector<12x32xf32>
    %cst_19 = arith.constant 0.000000e+00 : f32
    %69 = vector.broadcast %cst_19 : f32 to vector<12x32xf32>
    %70 = arith.maximumf %68, %69 : vector<12x32xf32>
    %71 = arith.truncf %70 : vector<12x32xf32> to vector<12x32xbf16>
    %72 = vector.extract_strided_slice %71 {offsets = [0, 0], sizes = [4, 32], strides = [1, 1]} : vector<12x32xbf16> to vector<4x32xbf16>
    %73 = vector.extract_strided_slice %71 {offsets = [4, 0], sizes = [4, 32], strides = [1, 1]} : vector<12x32xbf16> to vector<4x32xbf16>
    %74 = vector.extract_strided_slice %71 {offsets = [8, 0], sizes = [4, 32], strides = [1, 1]} : vector<12x32xbf16> to vector<4x32xbf16>
    %75 = tpu.concatenate %72, %73, %74 in 1 : vector<4x32xbf16>, vector<4x32xbf16>, vector<4x32xbf16> -> vector<4x96xbf16>
    %c704 = arith.constant 704 : index
    %c0_20 = arith.constant 0 : index
    %76 = vector.load %arg2[%c704, %c0_20] : memref<888x32xbf16, #tpu.memory_space<vmem>>, vector<96x32xbf16>
    %cst_21 = arith.constant dense<0.000000e+00> : vector<4x32xf32>
    %77 = tpu.matmul %75, %76, %cst_21 {dimension_numbers = #tpu.dot_dimension_numbers<[1], [0], [0], [1], [0, 0, 1, 1], [], []>} : vector<4x96xbf16>, vector<96x32xbf16>, vector<4x32xf32> -> vector<4x32xf32>
    %c8 = arith.constant 8 : index
    %c0_22 = arith.constant 0 : index
    %78 = vector.load %arg3[%c8, %c0_22] : memref<12x32xf32, #tpu.memory_space<vmem>>, vector<1x32xf32>
    %79 = vector.broadcast %78 : vector<1x32xf32> to vector<4x32xf32>
    %80 = arith.addf %77, %79 : vector<4x32xf32>
    %cst_23 = arith.constant 0.000000e+00 : f32
    %81 = vector.broadcast %cst_23 : f32 to vector<4x32xf32>
    %82 = arith.maximumf %80, %81 : vector<4x32xf32>
    %83 = vector.extract_strided_slice %41 {offsets = [0, 15, 0], sizes = [4, 1, 32], strides = [1, 1, 1]} : vector<4x16x32xbf16> to vector<4x1x32xbf16>
    %84 = vector.shape_cast %83 : vector<4x1x32xbf16> to vector<4x32xbf16>
    %85 = arith.extf %84 : vector<4x32xbf16> to vector<4x32xf32>
    %86 = arith.addf %82, %85 : vector<4x32xf32>
    %cst_24 = arith.constant 0.000000e+00 : f32
    %87 = vector.broadcast %cst_24 : f32 to vector<4x32xf32>
    %88 = arith.maximumf %86, %87 : vector<4x32xf32>
    %89 = arith.truncf %88 : vector<4x32xf32> to vector<4x32xbf16>
    %c800 = arith.constant 800 : index
    %c0_25 = arith.constant 0 : index
    %90 = vector.load %arg2[%c800, %c0_25] : memref<888x32xbf16, #tpu.memory_space<vmem>>, vector<32x16xbf16>
    %cst_26 = arith.constant dense<0.000000e+00> : vector<4x16xf32>
    %91 = tpu.matmul %89, %90, %cst_26 {dimension_numbers = #tpu.dot_dimension_numbers<[1], [0], [0], [1], [0, 0, 1, 1], [], []>} : vector<4x32xbf16>, vector<32x16xbf16>, vector<4x16xf32> -> vector<4x16xf32>
    %c9 = arith.constant 9 : index
    %c0_27 = arith.constant 0 : index
    %92 = vector.load %arg3[%c9, %c0_27] : memref<12x32xf32, #tpu.memory_space<vmem>>, vector<1x16xf32>
    %93 = vector.broadcast %92 : vector<1x16xf32> to vector<4x16xf32>
    %94 = arith.addf %91, %93 : vector<4x16xf32>
    %cst_28 = arith.constant 0.000000e+00 : f32
    %95 = vector.broadcast %cst_28 : f32 to vector<4x16xf32>
    %96 = arith.subf %95, %94 : vector<4x16xf32>
    %97 = math.exp %96 : vector<4x16xf32>
    %cst_29 = arith.constant 1.000000e+00 : f32
    %98 = vector.broadcast %cst_29 : f32 to vector<4x16xf32>
    %99 = arith.addf %98, %97 : vector<4x16xf32>
    %cst_30 = arith.constant 1.000000e+00 : f32
    %100 = vector.broadcast %cst_30 : f32 to vector<4x16xf32>
    %101 = arith.divf %100, %99 : vector<4x16xf32>
    %102 = arith.truncf %101 : vector<4x16xf32> to vector<4x16xbf16>
    %c0_31 = arith.constant 0 : index
    %c0_32 = arith.constant 0 : index
    %103 = vector.load %arg3[%c0_31, %c0_32] : memref<12x32xf32, #tpu.memory_space<vmem>>, vector<4x16xf32>
    %104 = arith.truncf %103 : vector<4x16xf32> to vector<4x16xbf16>
    %c832 = arith.constant 832 : index
    %c0_33 = arith.constant 0 : index
    %105 = vector.load %arg2[%c832, %c0_33] : memref<888x32xbf16, #tpu.memory_space<vmem>>, vector<16x24xbf16>
    %cst_34 = arith.constant dense<0.000000e+00> : vector<4x24xf32>
    %106 = tpu.matmul %102, %105, %cst_34 {dimension_numbers = #tpu.dot_dimension_numbers<[1], [0], [0], [1], [0, 0, 1, 1], [], []>} : vector<4x16xbf16>, vector<16x24xbf16>, vector<4x24xf32> -> vector<4x24xf32>
    %c848 = arith.constant 848 : index
    %c0_35 = arith.constant 0 : index
    %107 = vector.load %arg2[%c848, %c0_35] : memref<888x32xbf16, #tpu.memory_space<vmem>>, vector<16x24xbf16>
    %cst_36 = arith.constant dense<0.000000e+00> : vector<4x24xf32>
    %108 = tpu.matmul %104, %107, %cst_36 {dimension_numbers = #tpu.dot_dimension_numbers<[1], [0], [0], [1], [0, 0, 1, 1], [], []>} : vector<4x16xbf16>, vector<16x24xbf16>, vector<4x24xf32> -> vector<4x24xf32>
    %109 = arith.addf %106, %108 : vector<4x24xf32>
    %c10 = arith.constant 10 : index
    %c0_37 = arith.constant 0 : index
    %110 = vector.load %arg3[%c10, %c0_37] : memref<12x32xf32, #tpu.memory_space<vmem>>, vector<1x24xf32>
    %111 = vector.broadcast %110 : vector<1x24xf32> to vector<4x24xf32>
    %112 = arith.addf %109, %111 : vector<4x24xf32>
    %113 = math.tanh %112 : vector<4x24xf32>
    %114 = arith.truncf %113 : vector<4x24xf32> to vector<4x24xbf16>
    %c864 = arith.constant 864 : index
    %c0_38 = arith.constant 0 : index
    %115 = vector.load %arg2[%c864, %c0_38] : memref<888x32xbf16, #tpu.memory_space<vmem>>, vector<24x24xbf16>
    %cst_39 = arith.constant dense<0.000000e+00> : vector<4x24xf32>
    %116 = tpu.matmul %114, %115, %cst_39 {dimension_numbers = #tpu.dot_dimension_numbers<[1], [0], [0], [1], [0, 0, 1, 1], [], []>} : vector<4x24xbf16>, vector<24x24xbf16>, vector<4x24xf32> -> vector<4x24xf32>
    %c11 = arith.constant 11 : index
    %c0_40 = arith.constant 0 : index
    %117 = vector.load %arg3[%c11, %c0_40] : memref<12x32xf32, #tpu.memory_space<vmem>>, vector<1x24xf32>
    %118 = vector.broadcast %117 : vector<1x24xf32> to vector<4x24xf32>
    %119 = arith.addf %116, %118 : vector<4x24xf32>
    %120 = tpu.concatenate %113, %119 in 1 : vector<4x24xf32>, vector<4x24xf32> -> vector<4x48xf32>
    %c0_41 = arith.constant 0 : index
    %c0_42 = arith.constant 0 : index
    %121 = vector.load %arg4[%c0_41, %c0_42] : memref<4x48xf32, #tpu.memory_space<vmem>>, vector<4x48xf32>
    tpu.vector_store %arg4[%c0_41, %c0_42], %120 {strides = array<i32>} : memref<4x48xf32, #tpu.memory_space<vmem>>, vector<4x48xf32>,
    return
  }
  func.func @transform_0(%arg0: i32) -> (i32, i32, i32) {
    %c0_i32 = arith.constant 0 : i32
    %c0_i32_0 = arith.constant 0 : i32
    %c0_i32_1 = arith.constant 0 : i32
    %c0_i32_2 = arith.constant 0 : i32
    return %c0_i32, %c0_i32_0, %c0_i32_1 : i32, i32, i32
  }
  func.func @transform_1(%arg0: i32) -> (i32, i32) {
    %c0_i32 = arith.constant 0 : i32
    %c0_i32_0 = arith.constant 0 : i32
    %c0_i32_1 = arith.constant 0 : i32
    return %c0_i32, %c0_i32_0 : i32, i32
  }
  func.func @transform_2(%arg0: i32) -> (i32, i32) {
    %c0_i32 = arith.constant 0 : i32
    %c0_i32_0 = arith.constant 0 : i32
    %c0_i32_1 = arith.constant 0 : i32
    return %c0_i32, %c0_i32_0 : i32, i32
  }
  func.func @transform_3(%arg0: i32) -> (i32, i32) {
    %c0_i32 = arith.constant 0 : i32
    %c0_i32_0 = arith.constant 0 : i32
    %c0_i32_1 = arith.constant 0 : i32
    return %c0_i32, %c0_i32_0 : i32, i32
  }
}

</mosaic_0001>

<llo_original>
// kernel: forward.1
$region0: #{forward.1}
  #allocation0 [shape = 'u32[]', space=smem, size = 0x4, offset = 0x4, fixed_abs, tag = 'smem constant byte address 0x4 - core index']
  #allocation1 [shape = 'u32[144,128]{1,0:T(1,128)}', space=vmem, size = 0x12000, scoped, tag = 'internal scratch']
  %s0 = inlined_call_operand.vmem [shape: bf16[4,16,128], index: 0, kind: input, shape index: {}]
  %s1 = inlined_call_operand.vmem [shape: bf16[888,32], index: 1, kind: input, shape index: {}]
  %s2 = inlined_call_operand.vmem [shape: f32[12,32], index: 2, kind: input, shape index: {}]
  %s3 = inlined_call_operand.vmem [shape: f32[4,48], index: 3, kind: output, shape index: {}]
  %s4 = sld [smem:[#allocation0]]
  $region22: #{forward.1} parent=0
    _
  %s6 = ssub.s32 1, %s4
  %s7 = scalar_select 0, %s6, %s4
  // Predicated region
  $region2: #{forward.1} parent=0 // pred_check
    _
  $region3: #{forward.1} parent=0 // pred_check_branch
    %9 = sbr.rel (0) target = $region5
  $region4: #{forward.1} parent=0 // pred_region
    _
  $region5: #{forward.1} parent=0 // pred_fallthru
    _
  // Predicated region
  $region6: #{forward.1} parent=0 // pred_check
    _
  $region7: #{forward.1} parent=0 // pred_check_branch
    %11 = sbr.rel (0) target = $region9
  $region8: #{forward.1} parent=0 // pred_region
    _
  $region9: #{forward.1} parent=0 // pred_fallthru
    _
  // Predicated region
  $region10: #{forward.1} parent=0 // pred_check
    _
  $region11: #{forward.1} parent=0 // pred_check_branch
    %13 = sbr.rel (0) target = $region13
  $region12: #{forward.1} parent=0 // pred_region
    _
  $region13: #{forward.1} parent=0 // pred_fallthru
    _
  %v15 = vld [vmem:[%s0] sm:$0xf]
  %v16 = vld [vmem:[%s0 + $0x4] sm:$0xf]
  %v17 = vld [vmem:[%s0 + $0x8] sm:$0xf]
  %v18 = vld [vmem:[%s0 + $0xc] sm:$0xf]
  %v19 = vld [vmem:[%s0 + $0x10] sm:$0xf]
  %v20 = vld [vmem:[%s0 + $0x14] sm:$0xf]
  %v21 = vld [vmem:[%s0 + $0x18] sm:$0xf]
  %v22 = vld [vmem:[%s0 + $0x1c] sm:$0xf]
  %v31 = vunpack.c.l.b16 %v15
  %v32 = vunpack.c.l.b16 %v16
  %v33 = vunpack.c.l.b16 %v17
  %v34 = vunpack.c.l.b16 %v18
  %v35 = vunpack.c.l.b16 %v19
  %v36 = vunpack.c.l.b16 %v20
  %v37 = vunpack.c.l.b16 %v21
  %v38 = vunpack.c.l.b16 %v22
  %v39 = vpack.c.b16 %v32, %v31
  %v40 = vpack.c.b16 %v34, %v33
  %v41 = vpack.c.b16 %v36, %v35
  %v42 = vpack.c.b16 %v38, %v37
  %v43 = vrot.slane %v39, 7
  %v44 = vrot.slane %v40, 7
  %v45 = vrot.slane %v41, 7
  %v46 = vrot.slane %v42, 7
  %vm47 = vcmask 1040384
  %v50 = vsel %vm47, 0, %v43
  %v53 = vsel %vm47, 0, %v44
  %v56 = vsel %vm47, 0, %v45
  %v59 = vsel %vm47, 0, %v46
  %vm61 = vsmask.f32 7424
  %v62 = vshrl.u32 %v50, 16
  %v64 = vshll.u32 %v50, 16
  %v66 = vrot.slane %v64, 1
  %v67 = vor.u32 %v62, %v66
  %v68 = vshll.u32 %v43, 16
  %v70 = vrot.slane %v68, 1
  %v71 = vsel %vm61, %v67, %v70
  %v72 = vshrl.u32 %v53, 16
  %v74 = vshll.u32 %v53, 16
  %v76 = vrot.slane %v74, 1
  %v77 = vor.u32 %v72, %v76
  %v78 = vshll.u32 %v44, 16
  %v80 = vrot.slane %v78, 1
  %v81 = vsel %vm61, %v77, %v80
  %v82 = vshrl.u32 %v56, 16
  %v84 = vshll.u32 %v56, 16
  %v86 = vrot.slane %v84, 1
  %v87 = vor.u32 %v82, %v86
  %v88 = vshll.u32 %v45, 16
  %v90 = vrot.slane %v88, 1
  %v91 = vsel %vm61, %v87, %v90
  %v92 = vshrl.u32 %v59, 16
  %v94 = vshll.u32 %v59, 16
  %v96 = vrot.slane %v94, 1
  %v97 = vor.u32 %v92, %v96
  %v98 = vshll.u32 %v46, 16
  %v100 = vrot.slane %v98, 1
  %v101 = vsel %vm61, %v97, %v100
  %vm110 = vcmask 1046528
  %v111 = vrot.slane %v50, 1
  %v112 = vrot.slane %v43, 1
  %v113 = vsel %vm110, %v111, %v112
  %v114 = vrot.slane %v53, 1
  %v115 = vrot.slane %v44, 1
  %v116 = vsel %vm110, %v114, %v115
  %v117 = vrot.slane %v56, 1
  %v118 = vrot.slane %v45, 1
  %v119 = vsel %vm110, %v117, %v118
  %v120 = vrot.slane %v59, 1
  %v121 = vrot.slane %v46, 1
  %v122 = vsel %vm110, %v120, %v121
  %v127 = vld [vmem:[%s1] sm:$0xf]
  %v128 = vld [vmem:[%s1 + $0x4] sm:$0xf]
  %v129 = vld [vmem:[%s1 + $0x8] sm:$0xf]
  %v130 = vld [vmem:[%s1 + $0xc] sm:$0xf]
  %v131 = vld [vmem:[%s1 + $0x10] sm:$0xf]
  %v132 = vld [vmem:[%s1 + $0x14] sm:$0xf]
  %v133 = vld [vmem:[%s1 + $0x18] sm:$0xf]
  %v134 = vld [vmem:[%s1 + $0x1c] sm:$0xf]
  %v135 = vld [vmem:[%s1 + $0x20] sm:$0xf]
  %v136 = vld [vmem:[%s1 + $0x24] sm:$0xf]
  %v137 = vld [vmem:[%s1 + $0x28] sm:$0xf]
  %v138 = vld [vmem:[%s1 + $0x2c] sm:$0xf]
  %v139 = vld [vmem:[%s1 + $0x30] sm:$0xf]
  %v140 = vld [vmem:[%s1 + $0x34] sm:$0xf]
  %v141 = vld [vmem:[%s1 + $0x38] sm:$0xf]
  %v142 = vld [vmem:[%s1 + $0x3c] sm:$0xf]
  %v143 = vld [vmem:[%s1 + $0x40] sm:$0xf]
  %v144 = vld [vmem:[%s1 + $0x44] sm:$0xf]
  %v145 = vld [vmem:[%s1 + $0x48] sm:$0xf]
  %v146 = vld [vmem:[%s1 + $0x4c] sm:$0xf]
  %v147 = vld [vmem:[%s1 + $0x50] sm:$0xf]
  %v148 = vld [vmem:[%s1 + $0x54] sm:$0xf]
  %v149 = vld [vmem:[%s1 + $0x58] sm:$0xf]
  %v150 = vld [vmem:[%s1 + $0x5c] sm:$0xf]
  %v151 = vld [vmem:[%s1 + $0x60] sm:$0xf]
  %v152 = vld [vmem:[%s1 + $0x64] sm:$0xf]
  %v153 = vld [vmem:[%s1 + $0x68] sm:$0xf]
  %v154 = vld [vmem:[%s1 + $0x6c] sm:$0xf]
  %v155 = vld [vmem:[%s1 + $0x70] sm:$0xf]
  %v156 = vld [vmem:[%s1 + $0x74] sm:$0xf]
  %v157 = vld [vmem:[%s1 + $0x78] sm:$0xf]
  %v158 = vld [vmem:[%s1 + $0x7c] sm:$0xf]
  %v159 = vld [vmem:[%s1 + $0x80] sm:$0xf]
  %v160 = vld [vmem:[%s1 + $0x84] sm:$0xf]
  %v161 = vld [vmem:[%s1 + $0x88] sm:$0xf]
  %v162 = vld [vmem:[%s1 + $0x8c] sm:$0xf]
  %v163 = vld [vmem:[%s1 + $0x90] sm:$0xf]
  %v164 = vld [vmem:[%s1 + $0x94] sm:$0xf]
  %v165 = vld [vmem:[%s1 + $0x98] sm:$0xf]
  %v166 = vld [vmem:[%s1 + $0x9c] sm:$0xf]
  %v167 = vld [vmem:[%s1 + $0xa0] sm:$0xf]
  %v168 = vld [vmem:[%s1 + $0xa4] sm:$0xf]
  %v169 = vld [vmem:[%s1 + $0xa8] sm:$0xf]
  %v170 = vld [vmem:[%s1 + $0xac] sm:$0xf]
  %v171 = vld [vmem:[%s1 + $0xb0] sm:$0xf]
  %v172 = vld [vmem:[%s1 + $0xb4] sm:$0xf]
  %v173 = vld [vmem:[%s1 + $0xb8] sm:$0xf]
  %v174 = vld [vmem:[%s1 + $0xbc] sm:$0xf]
  %v175 = vld [vmem:[%s2 + $0x4] sm:$0x1]
  %v176 = vlaneseq
  %v177 = vshrl.u32 %v176, 7
  %v178 = vsub.s32 0, %v177
  %v179 = vrot.slane %v175, %v178
  %v228 = vunpack.c.l.b16 %v127
  %v229 = vunpack.c.l.b16 %v128
  %v230 = vunpack.c.l.b16 %v129
  %v231 = vunpack.c.l.b16 %v130
  %v232 = vunpack.c.l.b16 %v131
  %v233 = vunpack.c.l.b16 %v132
  %v234 = vunpack.c.l.b16 %v133
  %v235 = vunpack.c.l.b16 %v134
  %v236 = vunpack.c.l.b16 %v135
  %v237 = vunpack.c.l.b16 %v136
  %v238 = vunpack.c.l.b16 %v137
  %v239 = vunpack.c.l.b16 %v138
  %v240 = vunpack.c.l.b16 %v139
  %v241 = vunpack.c.l.b16 %v140
  %v242 = vunpack.c.l.b16 %v141
  %v243 = vunpack.c.l.b16 %v142
  %v244 = vunpack.c.l.b16 %v143
  %v245 = vunpack.c.l.b16 %v144
  %v246 = vunpack.c.l.b16 %v145
  %v247 = vunpack.c.l.b16 %v146
  %v248 = vunpack.c.l.b16 %v147
  %v249 = vunpack.c.l.b16 %v148
  %v250 = vunpack.c.l.b16 %v149
  %v251 = vunpack.c.l.b16 %v150
  %v252 = vunpack.c.l.b16 %v151
  %v253 = vunpack.c.l.b16 %v152
  %v254 = vunpack.c.l.b16 %v153
  %v255 = vunpack.c.l.b16 %v154
  %v256 = vunpack.c.l.b16 %v155
  %v257 = vunpack.c.l.b16 %v156
  %v258 = vunpack.c.l.b16 %v157
  %v259 = vunpack.c.l.b16 %v158
  %v260 = vunpack.c.l.b16 %v159
  %v261 = vunpack.c.l.b16 %v160
  %v262 = vunpack.c.l.b16 %v161
  %v263 = vunpack.c.l.b16 %v162
  %v264 = vunpack.c.l.b16 %v163
  %v265 = vunpack.c.l.b16 %v164
  %v266 = vunpack.c.l.b16 %v165
  %v267 = vunpack.c.l.b16 %v166
  %v268 = vunpack.c.l.b16 %v167
  %v269 = vunpack.c.l.b16 %v168
  %v270 = vunpack.c.l.b16 %v169
  %v271 = vunpack.c.l.b16 %v170
  %v272 = vunpack.c.l.b16 %v171
  %v273 = vunpack.c.l.b16 %v172
  %v274 = vunpack.c.l.b16 %v173
  %v275 = vunpack.c.l.b16 %v174
  %v276 = vpack.c.b16 %v229, %v228
  %v277 = vpack.c.b16 %v231, %v230
  %v278 = vpack.c.b16 %v233, %v232
  %v279 = vpack.c.b16 %v235, %v234
  %v280 = vpack.c.b16 %v237, %v236
  %v281 = vpack.c.b16 %v239, %v238
  %v282 = vpack.c.b16 %v241, %v240
  %v283 = vpack.c.b16 %v243, %v242
  %v284 = vpack.c.b16 %v245, %v244
  %v285 = vpack.c.b16 %v247, %v246
  %v286 = vpack.c.b16 %v249, %v248
  %v287 = vpack.c.b16 %v251, %v250
  %v288 = vpack.c.b16 %v253, %v252
  %v289 = vpack.c.b16 %v255, %v254
  %v290 = vpack.c.b16 %v257, %v256
  %v291 = vpack.c.b16 %v259, %v258
  %v292 = vpack.c.b16 %v261, %v260
  %v293 = vpack.c.b16 %v263, %v262
  %v294 = vpack.c.b16 %v265, %v264
  %v295 = vpack.c.b16 %v267, %v266
  %v296 = vpack.c.b16 %v269, %v268
  %v297 = vpack.c.b16 %v271, %v270
  %v298 = vpack.c.b16 %v273, %v272
  %v299 = vpack.c.b16 %v275, %v274
  %324 = vmatprep.subr.bf16.mxu0 0
  %325 = vmatpush1.bf16.msra.mxu0 %v276
  %326 = vmatprep.subr.bf16.mxu0 0
  %327 = vmatpush1.bf16.msra.mxu0 %v277
  %328 = vmatprep.subr.bf16.mxu0 0
  %329 = vmatpush1.bf16.msra.mxu0 %v278
  %330 = vmatprep.subr.bf16.mxu0 0
  %331 = vmatpush1.bf16.msra.mxu0 %v279
  %332 = vmatprep.subr.bf16.mxu0 0
  %333 = vmatpush1.bf16.msra.mxu0 %v280
  %334 = vmatprep.subr.bf16.mxu0 0
  %335 = vmatpush1.bf16.msra.mxu0 %v281
  %336 = vmatprep.subr.bf16.mxu0 0
  %337 = vmatpush1.bf16.msra.mxu0 %v282
  %338 = vmatprep.subr.bf16.mxu0 0
  %339 = vmatpush1.bf16.msra.mxu0 %v283
  %340 = vmatprep.subr.bf16.mxu0 0
  %341 = vmatpush1.bf16.msra.mxu0 %v284
  %342 = vmatprep.subr.bf16.mxu0 0
  %343 = vmatpush1.bf16.msra.mxu0 %v285
  %344 = vmatprep.subr.bf16.mxu0 0
  %345 = vmatpush1.bf16.msra.mxu0 %v286
  %346 = vmatprep.subr.bf16.mxu0 0
  %347 = vmatpush1.bf16.msra.mxu0 %v287
  %348 = vmatprep.subr.bf16.mxu0 0
  %349 = vmatpush1.bf16.msra.mxu0 %v288
  %350 = vmatprep.subr.bf16.mxu0 0
  %351 = vmatpush1.bf16.msra.mxu0 %v289
  %352 = vmatprep.subr.bf16.mxu0 0
  %353 = vmatpush1.bf16.msra.mxu0 %v290
  %354 = vmatprep.subr.bf16.mxu0 0
  %355 = vmatpush1.bf16.msra.mxu0 %v291
  %356 = vmatprep.mubr.bf16.mxu0 %v71
  %357 = vmatmul.mubr.bf16.gmra.mrb[0].mxu0 %v50
  %v358 = vpop.f32.mrb[0].mxu0
  %v359 = vadd.f32 %v179, %v358
  %v360 = vpop.f32.mrb[0].mxu0
  %v361 = vpop.f32.mrb[0].mxu0
  %v362 = vadd.f32 %v179, %v361
  %v363 = vpop.f32.mrb[0].mxu0
  %364 = vmatprep.mubr.bf16.mxu0 %v81
  %365 = vmatmul.mubr.bf16.gmra.mrb[0].mxu0 %v53
  %v366 = vpop.f32.mrb[0].mxu0
  %v367 = vadd.f32 %v179, %v366
  %v368 = vpop.f32.mrb[0].mxu0
  %v369 = vpop.f32.mrb[0].mxu0
  %v370 = vadd.f32 %v179, %v369
  %v371 = vpop.f32.mrb[0].mxu0
  %372 = vmatprep.mubr.bf16.mxu0 %v91
  %373 = vmatmul.mubr.bf16.gmra.mrb[0].mxu0 %v56
  %v374 = vpop.f32.mrb[0].mxu0
  %v375 = vadd.f32 %v179, %v374
  %v376 = vpop.f32.mrb[0].mxu0
  %v377 = vpop.f32.mrb[0].mxu0
  %v378 = vadd.f32 %v179, %v377
  %v379 = vpop.f32.mrb[0].mxu0
  %380 = vmatprep.mubr.bf16.mxu0 %v101
  %381 = vmatmul.mubr.bf16.gmra.mrb[0].mxu0 %v59
  %v382 = vpop.f32.mrb[0].mxu0
  %v383 = vadd.f32 %v179, %v382
  %v384 = vpop.f32.mrb[0].mxu0
  %v385 = vpop.f32.mrb[0].mxu0
  %v386 = vadd.f32 %v179, %v385
  %v387 = vpop.f32.mrb[0].mxu0
  %388 = vdwg.mxu0
  %389 = vmatprep.subr.bf16.mxu0 0
  %390 = vmatpush1.bf16.msra.mxu0 %v292
  %391 = vmatprep.subr.bf16.mxu0 0
  %392 = vmatpush1.bf16.msra.mxu0 %v293
  %393 = vmatprep.subr.bf16.mxu0 0
  %394 = vmatpush1.bf16.msra.mxu0 %v294
  %395 = vmatprep.subr.bf16.mxu0 0
  %396 = vmatpush1.bf16.msra.mxu0 %v295
  %397 = vmatprep.subr.bf16.mxu0 0
  %398 = vmatpush1.bf16.msra.mxu0 %v296
  %399 = vmatprep.subr.bf16.mxu0 0
  %400 = vmatpush1.bf16.msra.mxu0 %v297
  %401 = vmatprep.subr.bf16.mxu0 0
  %402 = vmatpush1.bf16.msra.mxu0 %v298
  %403 = vmatprep.subr.bf16.mxu0 0
  %404 = vmatpush1.bf16.msra.mxu0 %v299
  %405 = vmatprep.subr.bf16.mxu0 0
  %406 = vmatpush1.bf16.msra.mxu0 0
  %407 = vmatprep.subr.bf16.mxu0 0
  %408 = vmatpush1.bf16.msra.mxu0 0
  %409 = vmatprep.subr.bf16.mxu0 0
  %410 = vmatpush1.bf16.msra.mxu0 0
  %411 = vmatprep.subr.bf16.mxu0 0
  %412 = vmatpush1.bf16.msra.mxu0 0
  %413 = vmatprep.subr.bf16.mxu0 0
  %414 = vmatpush1.bf16.msra.mxu0 0
  %415 = vmatprep.subr.bf16.mxu0 0
  %416 = vmatpush1.bf16.msra.mxu0 0
  %417 = vmatprep.subr.bf16.mxu0 0
  %418 = vmatpush1.bf16.msra.mxu0 0
  %419 = vmatprep.subr.bf16.mxu0 0
  %420 = vmatpush1.bf16.msra.mxu0 0
  %421 = vmatprep.mubr.bf16.mxu0 0
  %422 = vmatmul.mubr.bf16.gmra.mrb[0].mxu0 %v113
  %v423 = vpop.f32.mrb[0].mxu0
  %v424 = vadd.f32 %v359, %v423
  %v425 = vpop.f32.mrb[0].mxu0
  %v426 = vpop.f32.mrb[0].mxu0
  %v427 = vadd.f32 %v362, %v426
  %v428 = vpop.f32.mrb[0].mxu0
  %429 = vmatprep.mubr.bf16.mxu0 0
  %430 = vmatmul.mubr.bf16.gmra.mrb[0].mxu0 %v116
  %v431 = vpop.f32.mrb[0].mxu0
  %v432 = vadd.f32 %v367, %v431
  %v433 = vpop.f32.mrb[0].mxu0
  %v434 = vpop.f32.mrb[0].mxu0
  %v435 = vadd.f32 %v370, %v434
  %v436 = vpop.f32.mrb[0].mxu0
  %437 = vmatprep.mubr.bf16.mxu0 0
  %438 = vmatmul.mubr.bf16.gmra.mrb[0].mxu0 %v119
  %v439 = vpop.f32.mrb[0].mxu0
  %v440 = vadd.f32 %v375, %v439
  %v441 = vpop.f32.mrb[0].mxu0
  %v442 = vpop.f32.mrb[0].mxu0
  %v443 = vadd.f32 %v378, %v442
  %v444 = vpop.f32.mrb[0].mxu0
  %445 = vmatprep.mubr.bf16.mxu0 0
  %446 = vmatmul.mubr.bf16.gmra.mrb[0].mxu0 %v122
  %v447 = vpop.f32.mrb[0].mxu0
  %v448 = vadd.f32 %v383, %v447
  %v449 = vpop.f32.mrb[0].mxu0
  %v450 = vpop.f32.mrb[0].mxu0
  %v451 = vadd.f32 %v386, %v450
  %v452 = vpop.f32.mrb[0].mxu0
  %453 = vdwg.mxu0
  %v454 = vmax.f32 %v424, 0.0
  %v455 = vmax.f32 %v427, 0.0
  %v456 = vmax.f32 %v432, 0.0
  %v457 = vmax.f32 %v435, 0.0
  %v458 = vmax.f32 %v440, 0.0
  %v459 = vmax.f32 %v443, 0.0
  %v460 = vmax.f32 %v448, 0.0
  %v461 = vmax.f32 %v451, 0.0
  %v462 = vpack.c.bf16 %v455, %v454
  %v463 = vpack.c.bf16 %v457, %v456
  %v464 = vpack.c.bf16 %v459, %v458
  %v465 = vpack.c.bf16 %v461, %v460
  %v470 = vrot.slane %v462, 7
  %v471 = vrot.slane %v463, 7
  %v472 = vrot.slane %v464, 7
  %v473 = vrot.slane %v465, 7
  %v475 = vsel %vm47, 0, %v470
  %v477 = vsel %vm47, 0, %v471
  %v479 = vsel %vm47, 0, %v472
  %v481 = vsel %vm47, 0, %v473
  %v482 = vshrl.u32 %v475, 16
  %v484 = vshll.u32 %v475, 16
  %v486 = vrot.slane %v484, 1
  %v487 = vor.u32 %v482, %v486
  %v488 = vshll.u32 %v470, 16
  %v490 = vrot.slane %v488, 1
  %v491 = vsel %vm61, %v487, %v490
  %v492 = vshrl.u32 %v477, 16
  %v494 = vshll.u32 %v477, 16
  %v496 = vrot.slane %v494, 1
  %v497 = vor.u32 %v492, %v496
  %v498 = vshll.u32 %v471, 16
  %v500 = vrot.slane %v498, 1
  %v501 = vsel %vm61, %v497, %v500
  %v502 = vshrl.u32 %v479, 16
  %v504 = vshll.u32 %v479, 16
  %v506 = vrot.slane %v504, 1
  %v507 = vor.u32 %v502, %v506
  %v508 = vshll.u32 %v472, 16
  %v510 = vrot.slane %v508, 1
  %v511 = vsel %vm61, %v507, %v510
  %v512 = vshrl.u32 %v481, 16
  %v514 = vshll.u32 %v481, 16
  %v516 = vrot.slane %v514, 1
  %v517 = vor.u32 %v512, %v516
  %v518 = vshll.u32 %v473, 16
  %v520 = vrot.slane %v518, 1
  %v521 = vsel %vm61, %v517, %v520
  %522 = vrot.lane.b32.xlu0 %v491, 32
  %v523 = vpop.permute.xlu0 %522
  %524 = vrot.lane.b32.xlu0 %v501, 32
  %v525 = vpop.permute.xlu0 %524
  %526 = vrot.lane.b32.xlu0 %v511, 32
  %v527 = vpop.permute.xlu0 %526
  %528 = vrot.lane.b32.xlu0 %v521, 32
  %v529 = vpop.permute.xlu0 %528
  %v534 = vrot.slane %v475, 1
  %v535 = vrot.slane %v470, 1
  %v536 = vsel %vm110, %v534, %v535
  %v537 = vrot.slane %v477, 1
  %v538 = vrot.slane %v471, 1
  %v539 = vsel %vm110, %v537, %v538
  %v540 = vrot.slane %v479, 1
  %v541 = vrot.slane %v472, 1
  %v542 = vsel %vm110, %v540, %v541
  %v543 = vrot.slane %v481, 1
  %v544 = vrot.slane %v473, 1
  %v545 = vsel %vm110, %v543, %v544
  %546 = vrot.lane.b32.xlu0 %v536, 64
  %v547 = vpop.permute.xlu0 %546
  %548 = vrot.lane.b32.xlu0 %v539, 64
  %v549 = vpop.permute.xlu0 %548
  %550 = vrot.lane.b32.xlu0 %v542, 64
  %v551 = vpop.permute.xlu0 %550
  %552 = vrot.lane.b32.xlu0 %v545, 64
  %v553 = vpop.permute.xlu0 %552
  %vm554 = vcmask 261120
  %v556 = vsel %vm554, %v475, %v523
  %v558 = vsel %vm554, %v477, %v525
  %v560 = vsel %vm554, %v479, %v527
  %v562 = vsel %vm554, %v481, %v529
  %vm563 = vcmask 523264
  %v565 = vsel %vm563, %v556, %v547
  %v567 = vsel %vm563, %v558, %v549
  %v569 = vsel %vm563, %v560, %v551
  %v571 = vsel %vm563, %v562, %v553
  %v572 = vld [vmem:[%s1 + $0xc0] sm:$0xf]
  %v573 = vld [vmem:[%s1 + $0xc4] sm:$0xf]
  %v574 = vld [vmem:[%s1 + $0xc8] sm:$0xf]
  %v575 = vld [vmem:[%s1 + $0xcc] sm:$0xf]
  %v576 = vld [vmem:[%s1 + $0xd0] sm:$0xf]
  %v577 = vld [vmem:[%s1 + $0xd4] sm:$0xf]
  %v578 = vld [vmem:[%s1 + $0xd8] sm:$0xf]
  %v579 = vld [vmem:[%s1 + $0xdc] sm:$0xf]
  %v580 = vld [vmem:[%s1 + $0xe0] sm:$0xf]
  %v581 = vld [vmem:[%s1 + $0xe4] sm:$0xf]
  %v582 = vld [vmem:[%s1 + $0xe8] sm:$0xf]
  %v583 = vld [vmem:[%s1 + $0xec] sm:$0xf]
  %v584 = vld [vmem:[%s2 + $0x5] sm:$0x1]
  %v585 = vlaneseq
  %v586 = vshrl.u32 %v585, 7
  %v587 = vsub.s32 0, %v586
  %v588 = vrot.slane %v584, %v587
  %v601 = vunpack.c.l.b16 %v572
  %v602 = vunpack.c.l.b16 %v573
  %v603 = vunpack.c.l.b16 %v574
  %v604 = vunpack.c.l.b16 %v575
  %v605 = vunpack.c.l.b16 %v576
  %v606 = vunpack.c.l.b16 %v577
  %v607 = vunpack.c.l.b16 %v578
  %v608 = vunpack.c.l.b16 %v579
  %v609 = vunpack.c.l.b16 %v580
  %v610 = vunpack.c.l.b16 %v581
  %v611 = vunpack.c.l.b16 %v582
  %v612 = vunpack.c.l.b16 %v583
  %v613 = vpack.c.b16 %v602, %v601
  %v614 = vpack.c.b16 %v604, %v603
  %v615 = vpack.c.b16 %v606, %v605
  %v616 = vpack.c.b16 %v608, %v607
  %v617 = vpack.c.b16 %v610, %v609
  %v618 = vpack.c.b16 %v612, %v611
  %vm625 = vcmask 785408
  %v626 = vsel %vm625, %v565, 0
  %v628 = vsel %vm625, %v567, 0
  %v630 = vsel %vm625, %v569, 0
  %v632 = vsel %vm625, %v571, 0
  %634 = vmatprep.subr.bf16.mxu0 0
  %635 = vmatpush1.bf16.msra.mxu0 %v613
  %636 = vmatprep.subr.bf16.mxu0 0
  %637 = vmatpush1.bf16.msra.mxu0 %v614
  %638 = vmatprep.subr.bf16.mxu0 0
  %639 = vmatpush1.bf16.msra.mxu0 %v615
  %640 = vmatprep.subr.bf16.mxu0 0
  %641 = vmatpush1.bf16.msra.mxu0 %v616
  %642 = vmatprep.subr.bf16.mxu0 0
  %643 = vmatpush1.bf16.msra.mxu0 %v617
  %644 = vmatprep.subr.bf16.mxu0 0
  %645 = vmatpush1.bf16.msra.mxu0 %v618
  %646 = vmatprep.subr.bf16.mxu0 0
  %647 = vmatpush1.bf16.msra.mxu0 0
  %648 = vmatprep.subr.bf16.mxu0 0
  %649 = vmatpush1.bf16.msra.mxu0 0
  %650 = vmatprep.subr.bf16.mxu0 0
  %651 = vmatpush1.bf16.msra.mxu0 0
  %652 = vmatprep.subr.bf16.mxu0 0
  %653 = vmatpush1.bf16.msra.mxu0 0
  %654 = vmatprep.subr.bf16.mxu0 0
  %655 = vmatpush1.bf16.msra.mxu0 0
  %656 = vmatprep.subr.bf16.mxu0 0
  %657 = vmatpush1.bf16.msra.mxu0 0
  %658 = vmatprep.subr.bf16.mxu0 0
  %659 = vmatpush1.bf16.msra.mxu0 0
  %660 = vmatprep.subr.bf16.mxu0 0
  %661 = vmatpush1.bf16.msra.mxu0 0
  %662 = vmatprep.subr.bf16.mxu0 0
  %663 = vmatpush1.bf16.msra.mxu0 0
  %664 = vmatprep.subr.bf16.mxu0 0
  %665 = vmatpush1.bf16.msra.mxu0 0
  %666 = vmatprep.mubr.bf16.mxu0 0
  %667 = vmatmul.mubr.bf16.gmra.mrb[0].mxu0 %v626
  %v668 = vpop.f32.mrb[0].mxu0
  %v669 = vadd.f32 %v588, %v668
  %v670 = vpop.f32.mrb[0].mxu0
  %v671 = vpop.f32.mrb[0].mxu0
  %v672 = vadd.f32 %v588, %v671
  %v673 = vpop.f32.mrb[0].mxu0
  %674 = vmatprep.mubr.bf16.mxu0 0
  %675 = vmatmul.mubr.bf16.gmra.mrb[0].mxu0 %v628
  %v676 = vpop.f32.mrb[0].mxu0
  %v677 = vadd.f32 %v588, %v676
  %v678 = vpop.f32.mrb[0].mxu0
  %v679 = vpop.f32.mrb[0].mxu0
  %v680 = vadd.f32 %v588, %v679
  %v681 = vpop.f32.mrb[0].mxu0
  %682 = vmatprep.mubr.bf16.mxu0 0
  %683 = vmatmul.mubr.bf16.gmra.mrb[0].mxu0 %v630
  %v684 = vpop.f32.mrb[0].mxu0
  %v685 = vadd.f32 %v588, %v684
  %v686 = vpop.f32.mrb[0].mxu0
  %v687 = vpop.f32.mrb[0].mxu0
  %v688 = vadd.f32 %v588, %v687
  %v689 = vpop.f32.mrb[0].mxu0
  %690 = vmatprep.mubr.bf16.mxu0 0
  %691 = vmatmul.mubr.bf16.gmra.mrb[0].mxu0 %v632
  %v692 = vpop.f32.mrb[0].mxu0
  %v693 = vadd.f32 %v588, %v692
  %v694 = vpop.f32.mrb[0].mxu0
  %v695 = vpop.f32.mrb[0].mxu0
  %v696 = vadd.f32 %v588, %v695
  %v697 = vpop.f32.mrb[0].mxu0
  %698 = vdwg.mxu0
  %v699 = vmax.f32 %v669, 0.0
  %v700 = vmax.f32 %v672, 0.0
  %v701 = vmax.f32 %v677, 0.0
  %v702 = vmax.f32 %v680, 0.0
  %v703 = vmax.f32 %v685, 0.0
  %v704 = vmax.f32 %v688, 0.0
  %v705 = vmax.f32 %v693, 0.0
  %v706 = vmax.f32 %v696, 0.0
  %v707 = vld [vmem:[%s1 + $0xf0] sm:$0xf]
  %v708 = vld [vmem:[%s1 + $0xf4] sm:$0xf]
  %v709 = vld [vmem:[%s1 + $0xf8] sm:$0xf]
  %v710 = vld [vmem:[%s1 + $0xfc] sm:$0xf]
  %v711 = vld [vmem:[%s1 + $0x100] sm:$0xf]
  %v712 = vld [vmem:[%s1 + $0x104] sm:$0xf]
  %v713 = vld [vmem:[%s1 + $0x108] sm:$0xf]
  %v714 = vld [vmem:[%s1 + $0x10c] sm:$0xf]
  %v715 = vld [vmem:[%s1 + $0x110] sm:$0xf]
  %v716 = vld [vmem:[%s1 + $0x114] sm:$0xf]
  %v717 = vld [vmem:[%s1 + $0x118] sm:$0xf]
  %v718 = vld [vmem:[%s1 + $0x11c] sm:$0xf]
  %v719 = vld [vmem:[%s1 + $0x120] sm:$0xf]
  %v720 = vld [vmem:[%s1 + $0x124] sm:$0xf]
  %v721 = vld [vmem:[%s1 + $0x128] sm:$0xf]
  %v722 = vld [vmem:[%s1 + $0x12c] sm:$0xf]
  %v723 = vld [vmem:[%s2 + $0x6] sm:$0x1]
  %v724 = vlaneseq
  %v725 = vshrl.u32 %v724, 7
  %v726 = vsub.s32 0, %v725
  %v727 = vrot.slane %v723, %v726
  %v748 = vunpack.c.l.b16 %v707
  %v749 = vunpack.c.l.b16 %v708
  %v750 = vunpack.c.l.b16 %v709
  %v751 = vunpack.c.l.b16 %v710
  %v752 = vunpack.c.l.b16 %v711
  %v753 = vunpack.c.l.b16 %v712
  %v754 = vunpack.c.l.b16 %v713
  %v755 = vunpack.c.l.b16 %v714
  %v756 = vunpack.c.l.b16 %v715
  %v757 = vunpack.c.l.b16 %v716
  %v758 = vunpack.c.l.b16 %v717
  %v759 = vunpack.c.l.b16 %v718
  %v760 = vunpack.c.l.b16 %v719
  %v761 = vunpack.c.l.b16 %v720
  %v762 = vunpack.c.l.b16 %v721
  %v763 = vunpack.c.l.b16 %v722
  %v764 = vpack.c.b16 %v749, %v748
  %v765 = vpack.c.b16 %v751, %v750
  %v766 = vpack.c.b16 %v753, %v752
  %v767 = vpack.c.b16 %v755, %v754
  %v768 = vpack.c.b16 %v757, %v756
  %v769 = vpack.c.b16 %v759, %v758
  %v770 = vpack.c.b16 %v761, %v760
  %v771 = vpack.c.b16 %v763, %v762
  %780 = vmatprep.subr.bf16.mxu0 0
  %781 = vmatpush1.bf16.msra.mxu0 %v764
  %782 = vmatprep.subr.bf16.mxu0 0
  %783 = vmatpush1.bf16.msra.mxu0 %v765
  %784 = vmatprep.subr.bf16.mxu0 0
  %785 = vmatpush1.bf16.msra.mxu0 %v766
  %786 = vmatprep.subr.bf16.mxu0 0
  %787 = vmatpush1.bf16.msra.mxu0 %v767
  %788 = vmatprep.subr.bf16.mxu0 0
  %789 = vmatpush1.bf16.msra.mxu0 %v768
  %790 = vmatprep.subr.bf16.mxu0 0
  %791 = vmatpush1.bf16.msra.mxu0 %v769
  %792 = vmatprep.subr.bf16.mxu0 0
  %793 = vmatpush1.bf16.msra.mxu0 %v770
  %794 = vmatprep.subr.bf16.mxu0 0
  %795 = vmatpush1.bf16.msra.mxu0 %v771
  %796 = vmatprep.subr.bf16.mxu0 0
  %797 = vmatpush1.bf16.msra.mxu0 0
  %798 = vmatprep.subr.bf16.mxu0 0
  %799 = vmatpush1.bf16.msra.mxu0 0
  %800 = vmatprep.subr.bf16.mxu0 0
  %801 = vmatpush1.bf16.msra.mxu0 0
  %802 = vmatprep.subr.bf16.mxu0 0
  %803 = vmatpush1.bf16.msra.mxu0 0
  %804 = vmatprep.subr.bf16.mxu0 0
  %805 = vmatpush1.bf16.msra.mxu0 0
  %806 = vmatprep.subr.bf16.mxu0 0
  %807 = vmatpush1.bf16.msra.mxu0 0
  %808 = vmatprep.subr.bf16.mxu0 0
  %809 = vmatpush1.bf16.msra.mxu0 0
  %810 = vmatprep.subr.bf16.mxu0 0
  %811 = vmatpush1.bf16.msra.mxu0 0
  %812 = vmatprep.mubr.bf16.mxu0 0
  %813 = vmatmul.mubr.bf16.gmra.mrb[0].mxu0 %v39
  %v814 = vpop.f32.mrb[0].mxu0
  %v815 = vadd.f32 %v727, %v814
  %v816 = vpop.f32.mrb[0].mxu0
  %v817 = vpop.f32.mrb[0].mxu0
  %v818 = vadd.f32 %v727, %v817
  %v819 = vpop.f32.mrb[0].mxu0
  %820 = vmatprep.mubr.bf16.mxu0 0
  %821 = vmatmul.mubr.bf16.gmra.mrb[0].mxu0 %v40
  %v822 = vpop.f32.mrb[0].mxu0
  %v823 = vadd.f32 %v727, %v822
  %v824 = vpop.f32.mrb[0].mxu0
  %v825 = vpop.f32.mrb[0].mxu0
  %v826 = vadd.f32 %v727, %v825
  %v827 = vpop.f32.mrb[0].mxu0
  %828 = vmatprep.mubr.bf16.mxu0 0
  %829 = vmatmul.mubr.bf16.gmra.mrb[0].mxu0 %v41
  %v830 = vpop.f32.mrb[0].mxu0
  %v831 = vadd.f32 %v727, %v830
  %v832 = vpop.f32.mrb[0].mxu0
  %v833 = vpop.f32.mrb[0].mxu0
  %v834 = vadd.f32 %v727, %v833
  %v835 = vpop.f32.mrb[0].mxu0
  %836 = vmatprep.mubr.bf16.mxu0 0
  %837 = vmatmul.mubr.bf16.gmra.mrb[0].mxu0 %v42
  %v838 = vpop.f32.mrb[0].mxu0
  %v839 = vadd.f32 %v727, %v838
  %v840 = vpop.f32.mrb[0].mxu0
  %v841 = vpop.f32.mrb[0].mxu0
  %v842 = vadd.f32 %v727, %v841
  %v843 = vpop.f32.mrb[0].mxu0
  %844 = vdwg.mxu0
  %v845 = vadd.f32 %v699, %v815
  %v846 = vadd.f32 %v700, %v818
  %v847 = vadd.f32 %v701, %v823
  %v848 = vadd.f32 %v702, %v826
  %v849 = vadd.f32 %v703, %v831
  %v850 = vadd.f32 %v704, %v834
  %v851 = vadd.f32 %v705, %v839
  %v852 = vadd.f32 %v706, %v842
  %v853 = vmax.f32 %v845, 0.0
  %v854 = vmax.f32 %v846, 0.0
  %v855 = vmax.f32 %v847, 0.0
  %v856 = vmax.f32 %v848, 0.0
  %v857 = vmax.f32 %v849, 0.0
  %v858 = vmax.f32 %v850, 0.0
  %v859 = vmax.f32 %v851, 0.0
  %v860 = vmax.f32 %v852, 0.0
  %v861 = vpack.c.bf16 %v854, %v853
  %v862 = vpack.c.bf16 %v856, %v855
  %v863 = vpack.c.bf16 %v858, %v857
  %v864 = vpack.c.bf16 %v860, %v859
  %v869 = vunpack.c.l.b16 %v861
  %v870 = vunpack.c.l.b16 %v862
  %v871 = vunpack.c.l.b16 %v863
  %v872 = vunpack.c.l.b16 %v864
  %v873 = vrot.slane %v870, 7
  %v874 = vrot.slane %v871, 6
  %vm875 = vcmask 1041409
  %v876 = vsel %vm875, %v874, %v873
  %v877 = vrot.slane %v872, 5
  %vm878 = vcmask 1042434
  %v879 = vsel %vm878, %v877, %v876
  %v880 = vpack.c.b16 %v879, %v869
  %v881 = vunpack.c.h.b16 %v861
  %v882 = vunpack.c.h.b16 %v862
  %v883 = vunpack.c.h.b16 %v863
  %v884 = vunpack.c.h.b16 %v864
  %v885 = vrot.slane %v881, 2
  %v886 = vrot.slane %v882, 1
  %v887 = vsel %vm875, %v883, %v886
  %v888 = vrot.slane %v884, 7
  %v889 = vsel %vm878, %v888, %v887
  %v890 = vpack.c.b16 %v889, %v885
  %891 = vrot.lane.b32.xlu0 %v890, 32
  %v892 = vpop.permute.xlu0 %891
  %v893 = vrot.slane %v881, 4
  %v894 = vrot.slane %v882, 3
  %v895 = vrot.slane %v883, 2
  %v896 = vsel %vm875, %v895, %v894
  %v897 = vrot.slane %v884, 1
  %v898 = vsel %vm878, %v897, %v896
  %v899 = vpack.c.b16 %v898, %v893
  %900 = vrot.lane.b32.xlu0 %v899, 64
  %v901 = vpop.permute.xlu0 %900
  %v904 = vsel %vm554, %v880, %v892
  %v906 = vsel %vm563, %v904, %v901
  %v907 = vrot.slane %v882, 7
  %v908 = vsel %vm878, %v907, %v881
  %v909 = vrot.slane %v883, 6
  %vm910 = vcmask 1043459
  %v911 = vsel %vm910, %v909, %v908
  %v912 = vrot.slane %v884, 5
  %vm913 = vcmask 1044484
  %v914 = vsel %vm913, %v912, %v911
  %v915 = vpack.c.b16 %v914, %v914
  %v916 = vsel %vm878, %v886, %v885
  %v917 = vsel %vm910, %v883, %v916
  %v918 = vsel %vm913, %v888, %v917
  %v919 = vpack.c.b16 %v918, %v918
  %920 = vrot.lane.b32.xlu0 %v919, 32
  %v921 = vpop.permute.xlu0 %920
  %v922 = vsel %vm878, %v894, %v893
  %v923 = vsel %vm910, %v895, %v922
  %v924 = vsel %vm913, %v897, %v923
  %v925 = vpack.c.b16 %v924, %v924
  %926 = vrot.lane.b32.xlu0 %v925, 64
  %v927 = vpop.permute.xlu0 %926
  %v930 = vsel %vm554, %v915, %v921
  %v932 = vsel %vm563, %v930, %v927
  %v933 = vsel %vm913, %v907, %v881
  %vm934 = vcmask 1045509
  %v935 = vsel %vm934, %v909, %v933
  %vm936 = vcmask 1046534
  %v937 = vsel %vm936, %v912, %v935
  %v938 = vpack.c.b16 %v937, %v937
  %v939 = vsel %vm913, %v886, %v885
  %v940 = vsel %vm934, %v883, %v939
  %v941 = vsel %vm936, %v888, %v940
  %v942 = vpack.c.b16 %v941, %v941
  %943 = vrot.lane.b32.xlu0 %v942, 32
  %v944 = vpop.permute.xlu0 %943
  %v945 = vsel %vm913, %v894, %v893
  %v946 = vsel %vm934, %v895, %v945
  %v947 = vsel %vm936, %v897, %v946
  %v948 = vpack.c.b16 %v947, %v947
  %949 = vrot.lane.b32.xlu0 %v948, 64
  %v950 = vpop.permute.xlu0 %949
  %v953 = vsel %vm554, %v938, %v944
  %v955 = vsel %vm563, %v953, %v950
  %v956 = vshrl.u32 %v906, 16
  %v958 = vrot.slane %v956, 3
  %v959 = vshll.u32 %v906, 16
  %v961 = vrot.slane %v959, 4
  %v962 = vor.u32 %v958, %v961
  %v963 = vshrl.u32 %v932, 16
  %v965 = vrot.slane %v963, 2
  %v966 = vshll.u32 %v932, 16
  %v968 = vrot.slane %v966, 3
  %v969 = vor.u32 %v965, %v968
  %v970 = vshrl.u32 %v955, 16
  %v972 = vrot.slane %v970, 1
  %v973 = vshll.u32 %v955, 16
  %v975 = vrot.slane %v973, 2
  %v976 = vor.u32 %v972, %v975
  %vm977 = vcmask 1041408
  %v980 = vsel %vm977, %v962, %v969
  %vm981 = vcmask 1043456
  %v983 = vsel %vm981, %v980, %v976
  %v984 = vld [vmem:[%s1 + $0x130] sm:$0xf]
  %v985 = vld [vmem:[%s1 + $0x134] sm:$0xf]
  %v986 = vld [vmem:[%s1 + $0x138] sm:$0xf]
  %v987 = vld [vmem:[%s1 + $0x13c] sm:$0xf]
  %v988 = vld [vmem:[%s1 + $0x140] sm:$0xf]
  %v989 = vld [vmem:[%s1 + $0x144] sm:$0xf]
  %v990 = vld [vmem:[%s1 + $0x148] sm:$0xf]
  %v991 = vld [vmem:[%s1 + $0x14c] sm:$0xf]
  %v992 = vld [vmem:[%s1 + $0x150] sm:$0xf]
  %v993 = vld [vmem:[%s1 + $0x154] sm:$0xf]
  %v994 = vld [vmem:[%s1 + $0x158] sm:$0xf]
  %v995 = vld [vmem:[%s1 + $0x15c] sm:$0xf]
  %v996 = vld [vmem:[%s2 + $0x7] sm:$0x1]
  %v997 = vlaneseq
  %v998 = vshrl.u32 %v997, 7
  %v999 = vsub.s32 0, %v998
  %v1000 = vrot.slane %v996, %v999
  %v1013 = vunpack.c.l.b16 %v984
  %v1014 = vunpack.c.l.b16 %v985
  %v1015 = vunpack.c.l.b16 %v986
  %v1016 = vunpack.c.l.b16 %v987
  %v1017 = vunpack.c.l.b16 %v988
  %v1018 = vunpack.c.l.b16 %v989
  %v1019 = vunpack.c.l.b16 %v990
  %v1020 = vunpack.c.l.b16 %v991
  %v1021 = vunpack.c.l.b16 %v992
  %v1022 = vunpack.c.l.b16 %v993
  %v1023 = vunpack.c.l.b16 %v994
  %v1024 = vunpack.c.l.b16 %v995
  %v1025 = vpack.c.b16 %v1014, %v1013
  %v1026 = vpack.c.b16 %v1016, %v1015
  %v1027 = vpack.c.b16 %v1018, %v1017
  %v1028 = vpack.c.b16 %v1020, %v1019
  %v1029 = vpack.c.b16 %v1022, %v1021
  %v1030 = vpack.c.b16 %v1024, %v1023
  %v1037 = vsel %vm625, %v983, 0
  %1039 = vmatprep.subr.bf16.mxu0 0
  %1040 = vmatpush1.bf16.msra.mxu0 %v1025
  %1041 = vmatprep.subr.bf16.mxu0 0
  %1042 = vmatpush1.bf16.msra.mxu0 %v1026
  %1043 = vmatprep.subr.bf16.mxu0 0
  %1044 = vmatpush1.bf16.msra.mxu0 %v1027
  %1045 = vmatprep.subr.bf16.mxu0 0
  %1046 = vmatpush1.bf16.msra.mxu0 %v1028
  %1047 = vmatprep.subr.bf16.mxu0 0
  %1048 = vmatpush1.bf16.msra.mxu0 %v1029
  %1049 = vmatprep.subr.bf16.mxu0 0
  %1050 = vmatpush1.bf16.msra.mxu0 %v1030
  %1051 = vmatprep.subr.bf16.mxu0 0
  %1052 = vmatpush1.bf16.msra.mxu0 0
  %1053 = vmatprep.subr.bf16.mxu0 0
  %1054 = vmatpush1.bf16.msra.mxu0 0
  %1055 = vmatprep.subr.bf16.mxu0 0
  %1056 = vmatpush1.bf16.msra.mxu0 0
  %1057 = vmatprep.subr.bf16.mxu0 0
  %1058 = vmatpush1.bf16.msra.mxu0 0
  %1059 = vmatprep.subr.bf16.mxu0 0
  %1060 = vmatpush1.bf16.msra.mxu0 0
  %1061 = vmatprep.subr.bf16.mxu0 0
  %1062 = vmatpush1.bf16.msra.mxu0 0
  %1063 = vmatprep.subr.bf16.mxu0 0
  %1064 = vmatpush1.bf16.msra.mxu0 0
  %1065 = vmatprep.subr.bf16.mxu0 0
  %1066 = vmatpush1.bf16.msra.mxu0 0
  %1067 = vmatprep.subr.bf16.mxu0 0
  %1068 = vmatpush1.bf16.msra.mxu0 0
  %1069 = vmatprep.subr.bf16.mxu0 0
  %1070 = vmatpush1.bf16.msra.mxu0 0
  %1071 = vmatprep.mubr.bf16.mxu0 0
  %1072 = vmatmul.mubr.bf16.gmra.mrb[0].mxu0 %v1037
  %v1073 = vpop.f32.mrb[0].mxu0
  %v1074 = vadd.f32 %v1000, %v1073
  %v1075 = vpop.f32.mrb[0].mxu0
  %v1076 = vpop.f32.mrb[0].mxu0
  %v1077 = vadd.f32 %v1000, %v1076
  %v1078 = vpop.f32.mrb[0].mxu0
  %1079 = vdwg.mxu0
  %v1080 = vmax.f32 %v1074, 0.0
  %v1081 = vmax.f32 %v1077, 0.0
  %v1082 = vpack.c.bf16 %v1081, %v1080
  %v1084 = vrot.slane %v1082, 2
  %1085 = vrot.lane.b32.xlu0 %v1084, 32
  %v1086 = vpop.permute.xlu0 %1085
  %v1087 = vrot.slane %v1082, 4
  %1088 = vrot.lane.b32.xlu0 %v1087, 64
  %v1089 = vpop.permute.xlu0 %1088
  %v1092 = vsel %vm554, %v1082, %v1086
  %v1094 = vsel %vm563, %v1092, %v1089
  %v1095 = vld [vmem:[%s1 + $0x160] sm:$0xf]
  %v1096 = vld [vmem:[%s1 + $0x164] sm:$0xf]
  %v1097 = vld [vmem:[%s1 + $0x168] sm:$0xf]
  %v1098 = vld [vmem:[%s1 + $0x16c] sm:$0xf]
  %v1099 = vld [vmem:[%s1 + $0x170] sm:$0xf]
  %v1100 = vld [vmem:[%s1 + $0x174] sm:$0xf]
  %v1101 = vld [vmem:[%s1 + $0x178] sm:$0xf]
  %v1102 = vld [vmem:[%s1 + $0x17c] sm:$0xf]
  %v1103 = vld [vmem:[%s1 + $0x180] sm:$0xf]
  %v1104 = vld [vmem:[%s1 + $0x184] sm:$0xf]
  %v1105 = vld [vmem:[%s1 + $0x188] sm:$0xf]
  %v1106 = vld [vmem:[%s1 + $0x18c] sm:$0xf]
  %v1107 = vld [vmem:[%s2 + $0x8] sm:$0x1]
  %v1108 = vlaneseq
  %v1109 = vshrl.u32 %v1108, 7
  %v1110 = vsub.s32 0, %v1109
  %v1111 = vrot.slane %v1107, %v1110
  %v1124 = vunpack.c.l.b16 %v1095
  %v1125 = vunpack.c.l.b16 %v1096
  %v1126 = vunpack.c.l.b16 %v1097
  %v1127 = vunpack.c.l.b16 %v1098
  %v1128 = vunpack.c.l.b16 %v1099
  %v1129 = vunpack.c.l.b16 %v1100
  %v1130 = vunpack.c.l.b16 %v1101
  %v1131 = vunpack.c.l.b16 %v1102
  %v1132 = vunpack.c.l.b16 %v1103
  %v1133 = vunpack.c.l.b16 %v1104
  %v1134 = vunpack.c.l.b16 %v1105
  %v1135 = vunpack.c.l.b16 %v1106
  %v1136 = vpack.c.b16 %v1125, %v1124
  %v1137 = vpack.c.b16 %v1127, %v1126
  %v1138 = vpack.c.b16 %v1129, %v1128
  %v1139 = vpack.c.b16 %v1131, %v1130
  %v1140 = vpack.c.b16 %v1133, %v1132
  %v1141 = vpack.c.b16 %v1135, %v1134
  %v1148 = vsel %vm625, %v1094, 0
  %1150 = vmatprep.subr.bf16.mxu0 0
  %1151 = vmatpush1.bf16.msra.mxu0 %v1136
  %1152 = vmatprep.subr.bf16.mxu0 0
  %1153 = vmatpush1.bf16.msra.mxu0 %v1137
  %1154 = vmatprep.subr.bf16.mxu0 0
  %1155 = vmatpush1.bf16.msra.mxu0 %v1138
  %1156 = vmatprep.subr.bf16.mxu0 0
  %1157 = vmatpush1.bf16.msra.mxu0 %v1139
  %1158 = vmatprep.subr.bf16.mxu0 0
  %1159 = vmatpush1.bf16.msra.mxu0 %v1140
  %1160 = vmatprep.subr.bf16.mxu0 0
  %1161 = vmatpush1.bf16.msra.mxu0 %v1141
  %1162 = vmatprep.subr.bf16.mxu0 0
  %1163 = vmatpush1.bf16.msra.mxu0 0
  %1164 = vmatprep.subr.bf16.mxu0 0
  %1165 = vmatpush1.bf16.msra.mxu0 0
  %1166 = vmatprep.subr.bf16.mxu0 0
  %1167 = vmatpush1.bf16.msra.mxu0 0
  %1168 = vmatprep.subr.bf16.mxu0 0
  %1169 = vmatpush1.bf16.msra.mxu0 0
  %1170 = vmatprep.subr.bf16.mxu0 0
  %1171 = vmatpush1.bf16.msra.mxu0 0
  %1172 = vmatprep.subr.bf16.mxu0 0
  %1173 = vmatpush1.bf16.msra.mxu0 0
  %1174 = vmatprep.subr.bf16.mxu0 0
  %1175 = vmatpush1.bf16.msra.mxu0 0
  %1176 = vmatprep.subr.bf16.mxu0 0
  %1177 = vmatpush1.bf16.msra.mxu0 0
  %1178 = vmatprep.subr.bf16.mxu0 0
  %1179 = vmatpush1.bf16.msra.mxu0 0
  %1180 = vmatprep.subr.bf16.mxu0 0
  %1181 = vmatpush1.bf16.msra.mxu0 0
  %1182 = vmatprep.mubr.bf16.mxu0 0
  %1183 = vmatmul.mubr.bf16.gmra.mrb[0].mxu0 %v1148
  %v1184 = vpop.f32.mrb[0].mxu0
  %v1185 = vadd.f32 %v1111, %v1184
  %v1186 = vpop.f32.mrb[0].mxu0
  %v1187 = vpop.f32.mrb[0].mxu0
  %v1188 = vpop.f32.mrb[0].mxu0
  %1189 = vdwg.mxu0
  %v1190 = vmax.f32 %v1185, 0.0
  %v1191 = vrot.slane %v861, 4
  %v1192 = vrot.slane %v862, 4
  %v1193 = vrot.slane %v863, 4
  %v1194 = vrot.slane %v864, 4
  %v1199 = vunpack.c.l.bf16 %v1191
  %v1200 = vunpack.c.l.bf16 %v1192
  %v1201 = vunpack.c.l.bf16 %v1193
  %v1202 = vunpack.c.l.bf16 %v1194
  %v1207 = vrot.slane %v1199, 7
  %v1208 = vrot.slane %v1200, 6
  %v1209 = vsel %vm875, %v1208, %v1207
  %v1210 = vrot.slane %v1201, 5
  %v1211 = vsel %vm878, %v1210, %v1209
  %v1212 = vrot.slane %v1202, 4
  %v1213 = vsel %vm910, %v1212, %v1211
  %v1215 = vadd.f32 %v1190, %v1213
  %v1216 = vmax.f32 %v1215, 0.0
  %v1217 = vpack.c.bf16 %v1216, %v1216
  %v1218 = vld [vmem:[%s1 + $0x190] sm:$0xf]
  %v1219 = vld [vmem:[%s1 + $0x194] sm:$0xf]
  %v1220 = vld [vmem:[%s1 + $0x198] sm:$0xf]
  %v1221 = vld [vmem:[%s1 + $0x19c] sm:$0xf]
  %v1222 = vld [vmem:[%s2 + $0x9] sm:$0x1]
  %v1223 = vlaneseq
  %v1224 = vshrl.u32 %v1223, 7
  %v1225 = vsub.s32 0, %v1224
  %v1226 = vrot.slane %v1222, %v1225
  %v1231 = vunpack.c.l.b16 %v1218
  %v1232 = vunpack.c.l.b16 %v1219
  %v1233 = vunpack.c.l.b16 %v1220
  %v1234 = vunpack.c.l.b16 %v1221
  %v1235 = vpack.c.b16 %v1232, %v1231
  %v1236 = vpack.c.b16 %v1234, %v1233
  %v1240 = vsel %vm554, %v1217, 0
  %1242 = vmatprep.subr.bf16.mxu0 0
  %1243 = vmatpush1.bf16.msra.mxu0 %v1235
  %1244 = vmatprep.subr.bf16.mxu0 0
  %1245 = vmatpush1.bf16.msra.mxu0 %v1236
  %1246 = vmatprep.subr.bf16.mxu0 0
  %1247 = vmatpush1.bf16.msra.mxu0 0
  %1248 = vmatprep.subr.bf16.mxu0 0
  %1249 = vmatpush1.bf16.msra.mxu0 0
  %1250 = vmatprep.subr.bf16.mxu0 0
  %1251 = vmatpush1.bf16.msra.mxu0 0
  %1252 = vmatprep.subr.bf16.mxu0 0
  %1253 = vmatpush1.bf16.msra.mxu0 0
  %1254 = vmatprep.subr.bf16.mxu0 0
  %1255 = vmatpush1.bf16.msra.mxu0 0
  %1256 = vmatprep.subr.bf16.mxu0 0
  %1257 = vmatpush1.bf16.msra.mxu0 0
  %1258 = vmatprep.subr.bf16.mxu0 0
  %1259 = vmatpush1.bf16.msra.mxu0 0
  %1260 = vmatprep.subr.bf16.mxu0 0
  %1261 = vmatpush1.bf16.msra.mxu0 0
  %1262 = vmatprep.subr.bf16.mxu0 0
  %1263 = vmatpush1.bf16.msra.mxu0 0
  %1264 = vmatprep.subr.bf16.mxu0 0
  %1265 = vmatpush1.bf16.msra.mxu0 0
  %1266 = vmatprep.subr.bf16.mxu0 0
  %1267 = vmatpush1.bf16.msra.mxu0 0
  %1268 = vmatprep.subr.bf16.mxu0 0
  %1269 = vmatpush1.bf16.msra.mxu0 0
  %1270 = vmatprep.subr.bf16.mxu0 0
  %1271 = vmatpush1.bf16.msra.mxu0 0
  %1272 = vmatprep.subr.bf16.mxu0 0
  %1273 = vmatpush1.bf16.msra.mxu0 0
  %1274 = vmatprep.mubr.bf16.mxu0 0
  %1275 = vmatmul.mubr.bf16.gmra.mrb[0].mxu0 %v1240
  %v1276 = vpop.f32.mrb[0].mxu0
  %v1277 = vadd.f32 %v1226, %v1276
  %v1278 = vpop.f32.mrb[0].mxu0
  %v1279 = vpop.f32.mrb[0].mxu0
  %v1280 = vpop.f32.mrb[0].mxu0
  %1281 = vdwg.mxu0
  %v1282 = vsub.f32 0.0, %v1277
  %v1283 = vmul.f32 %v1282, 1.442695
  %v1284 = vpow.pop %v1283
  %v1285 = vadd.f32 %v1284, 1.0
  %v1286 = vrcp.pop %v1285
  %v1287 = vmul.f32 1.0, %v1286
  %v1288 = vpack.c.bf16 %v1287, %v1287
  %v1289 = vld [vmem:[%s2] sm:$0xf]
  %v1290 = vpack.c.bf16 %v1289, %v1289
  %v1291 = vld [vmem:[%s1 + $0x1a0] sm:$0xf]
  %v1292 = vld [vmem:[%s1 + $0x1a4] sm:$0xf]
  %v1293 = vld [vmem:[%s1 + $0x1a8] sm:$0xf]
  %v1294 = vld [vmem:[%s1 + $0x1ac] sm:$0xf]
  %v1297 = vunpack.c.l.b16 %v1293
  %v1298 = vunpack.c.l.b16 %v1294
  %v1299 = vpack.c.b16 %v1298, %v1297
  %vm1301 = vcmask 130048
  %v1303 = vsel %vm1301, %v1290, 0
  %1305 = vmatprep.subr.bf16.mxu0 0
  %1306 = vmatpush1.bf16.msra.mxu0 %v1299
  %1307 = vmatprep.subr.bf16.mxu0 0
  %1308 = vmatpush1.bf16.msra.mxu0 0
  %1309 = vmatprep.subr.bf16.mxu0 0
  %1310 = vmatpush1.bf16.msra.mxu0 0
  %1311 = vmatprep.subr.bf16.mxu0 0
  %1312 = vmatpush1.bf16.msra.mxu0 0
  %1313 = vmatprep.subr.bf16.mxu0 0
  %1314 = vmatpush1.bf16.msra.mxu0 0
  %1315 = vmatprep.subr.bf16.mxu0 0
  %1316 = vmatpush1.bf16.msra.mxu0 0
  %1317 = vmatprep.subr.bf16.mxu0 0
  %1318 = vmatpush1.bf16.msra.mxu0 0
  %1319 = vmatprep.subr.bf16.mxu0 0
  %1320 = vmatpush1.bf16.msra.mxu0 0
  %1321 = vmatprep.subr.bf16.mxu0 0
  %1322 = vmatpush1.bf16.msra.mxu0 0
  %1323 = vmatprep.subr.bf16.mxu0 0
  %1324 = vmatpush1.bf16.msra.mxu0 0
  %1325 = vmatprep.subr.bf16.mxu0 0
  %1326 = vmatpush1.bf16.msra.mxu0 0
  %1327 = vmatprep.subr.bf16.mxu0 0
  %1328 = vmatpush1.bf16.msra.mxu0 0
  %1329 = vmatprep.subr.bf16.mxu0 0
  %1330 = vmatpush1.bf16.msra.mxu0 0
  %1331 = vmatprep.subr.bf16.mxu0 0
  %1332 = vmatpush1.bf16.msra.mxu0 0
  %1333 = vmatprep.subr.bf16.mxu0 0
  %1334 = vmatpush1.bf16.msra.mxu0 0
  %1335 = vmatprep.subr.bf16.mxu0 0
  %1336 = vmatpush1.bf16.msra.mxu0 0
  %1337 = vmatprep.mubr.bf16.mxu0 0
  %1338 = vmatmul.mubr.bf16.gmra.mrb[0].mxu0 %v1303
  %v1339 = vpop.f32.mrb[0].mxu0
  %v1340 = vadd.f32 0.0, %v1339
  %v1341 = vpop.f32.mrb[0].mxu0
  %v1342 = vpop.f32.mrb[0].mxu0
  %v1343 = vpop.f32.mrb[0].mxu0
  %1344 = vdwg.mxu0
  %v1347 = vunpack.c.l.b16 %v1291
  %v1348 = vunpack.c.l.b16 %v1292
  %v1349 = vpack.c.b16 %v1348, %v1347
  %v1352 = vsel %vm1301, %v1288, 0
  %1354 = vmatprep.subr.bf16.mxu0 0
  %1355 = vmatpush1.bf16.msra.mxu0 %v1349
  %1356 = vmatprep.subr.bf16.mxu0 0
  %1357 = vmatpush1.bf16.msra.mxu0 0
  %1358 = vmatprep.subr.bf16.mxu0 0
  %1359 = vmatpush1.bf16.msra.mxu0 0
  %1360 = vmatprep.subr.bf16.mxu0 0
  %1361 = vmatpush1.bf16.msra.mxu0 0
  %1362 = vmatprep.subr.bf16.mxu0 0
  %1363 = vmatpush1.bf16.msra.mxu0 0
  %1364 = vmatprep.subr.bf16.mxu0 0
  %1365 = vmatpush1.bf16.msra.mxu0 0
  %1366 = vmatprep.subr.bf16.mxu0 0
  %1367 = vmatpush1.bf16.msra.mxu0 0
  %1368 = vmatprep.subr.bf16.mxu0 0
  %1369 = vmatpush1.bf16.msra.mxu0 0
  %1370 = vmatprep.subr.bf16.mxu0 0
  %1371 = vmatpush1.bf16.msra.mxu0 0
  %1372 = vmatprep.subr.bf16.mxu0 0
  %1373 = vmatpush1.bf16.msra.mxu0 0
  %1374 = vmatprep.subr.bf16.mxu0 0
  %1375 = vmatpush1.bf16.msra.mxu0 0
  %1376 = vmatprep.subr.bf16.mxu0 0
  %1377 = vmatpush1.bf16.msra.mxu0 0
  %1378 = vmatprep.subr.bf16.mxu0 0
  %1379 = vmatpush1.bf16.msra.mxu0 0
  %1380 = vmatprep.subr.bf16.mxu0 0
  %1381 = vmatpush1.bf16.msra.mxu0 0
  %1382 = vmatprep.subr.bf16.mxu0 0
  %1383 = vmatpush1.bf16.msra.mxu0 0
  %1384 = vmatprep.subr.bf16.mxu0 0
  %1385 = vmatpush1.bf16.msra.mxu0 0
  %1386 = vmatprep.mubr.bf16.mxu0 0
  %1387 = vmatmul.mubr.bf16.gmra.mrb[0].mxu0 %v1352
  %v1388 = vpop.f32.mrb[0].mxu0
  %v1389 = vadd.f32 %v1340, %v1388
  %v1390 = vpop.f32.mrb[0].mxu0
  %v1391 = vpop.f32.mrb[0].mxu0
  %v1392 = vpop.f32.mrb[0].mxu0
  %1393 = vdwg.mxu0
  %v1394 = vld [vmem:[%s2 + $0xa] sm:$0x1]
  %v1395 = vlaneseq
  %v1396 = vshrl.u32 %v1395, 7
  %v1397 = vsub.s32 0, %v1396
  %v1398 = vrot.slane %v1394, %v1397
  %v1399 = vadd.f32 %v1389, %v1398
  %v1400 = vtanh.pop %v1399
  %v1401 = vpack.c.bf16 %v1400, %v1400
  %v1402 = vld [vmem:[%s1 + $0x1b0] sm:$0xf]
  %v1403 = vld [vmem:[%s1 + $0x1b4] sm:$0xf]
  %v1404 = vld [vmem:[%s1 + $0x1b8] sm:$0xf]
  %v1405 = vld [vmem:[%s2 + $0xb] sm:$0x1]
  %v1406 = vlaneseq
  %v1407 = vshrl.u32 %v1406, 7
  %v1408 = vsub.s32 0, %v1407
  %v1409 = vrot.slane %v1405, %v1408
  %v1413 = vunpack.c.l.b16 %v1402
  %v1414 = vunpack.c.l.b16 %v1403
  %v1415 = vunpack.c.l.b16 %v1404
  %v1416 = vpack.c.b16 %v1414, %v1413
  %v1417 = vpack.c.b16 %v1415, %v1415
  %vm1419 = vcmask 195584
  %v1421 = vsel %vm1419, %v1401, 0
  %v1424 = vsel %vm981, %v1417, 0
  %1426 = vmatprep.subr.bf16.mxu0 0
  %1427 = vmatpush1.bf16.msra.mxu0 %v1416
  %1428 = vmatprep.subr.bf16.mxu0 0
  %1429 = vmatpush1.bf16.msra.mxu0 %v1424
  %1430 = vmatprep.subr.bf16.mxu0 0
  %1431 = vmatpush1.bf16.msra.mxu0 0
  %1432 = vmatprep.subr.bf16.mxu0 0
  %1433 = vmatpush1.bf16.msra.mxu0 0
  %1434 = vmatprep.subr.bf16.mxu0 0
  %1435 = vmatpush1.bf16.msra.mxu0 0
  %1436 = vmatprep.subr.bf16.mxu0 0
  %1437 = vmatpush1.bf16.msra.mxu0 0
  %1438 = vmatprep.subr.bf16.mxu0 0
  %1439 = vmatpush1.bf16.msra.mxu0 0
  %1440 = vmatprep.subr.bf16.mxu0 0
  %1441 = vmatpush1.bf16.msra.mxu0 0
  %1442 = vmatprep.subr.bf16.mxu0 0
  %1443 = vmatpush1.bf16.msra.mxu0 0
  %1444 = vmatprep.subr.bf16.mxu0 0
  %1445 = vmatpush1.bf16.msra.mxu0 0
  %1446 = vmatprep.subr.bf16.mxu0 0
  %1447 = vmatpush1.bf16.msra.mxu0 0
  %1448 = vmatprep.subr.bf16.mxu0 0
  %1449 = vmatpush1.bf16.msra.mxu0 0
  %1450 = vmatprep.subr.bf16.mxu0 0
  %1451 = vmatpush1.bf16.msra.mxu0 0
  %1452 = vmatprep.subr.bf16.mxu0 0
  %1453 = vmatpush1.bf16.msra.mxu0 0
  %1454 = vmatprep.subr.bf16.mxu0 0
  %1455 = vmatpush1.bf16.msra.mxu0 0
  %1456 = vmatprep.subr.bf16.mxu0 0
  %1457 = vmatpush1.bf16.msra.mxu0 0
  %1458 = vmatprep.mubr.bf16.mxu0 0
  %1459 = vmatmul.mubr.bf16.gmra.mrb[0].mxu0 %v1421
  %v1460 = vpop.f32.mrb[0].mxu0
  %v1461 = vadd.f32 %v1409, %v1460
  %v1462 = vpop.f32.mrb[0].mxu0
  %v1463 = vpop.f32.mrb[0].mxu0
  %v1464 = vpop.f32.mrb[0].mxu0
  %1465 = vdwg.mxu0
  %1467 = vrot.lane.b32.xlu0 %v1461, 24
  %v1468 = vpop.permute.xlu0 %1467
  %v1470 = vsel %vm1419, %v1400, %v1468
  %vm1471 = vcmask 388096
  %1472 = vst.msk [vmem:[%s3] sm:$0xf] %vm1471, %v1470
  // Predicated region
  $region14: #{forward.1} parent=0 // pred_check
    _
  $region15: #{forward.1} parent=0 // pred_check_branch
    %1474 = sbr.rel (0) target = $region17
  $region16: #{forward.1} parent=0 // pred_region
    _
  $region17: #{forward.1} parent=0 // pred_fallthru
    _
  // Predicated region
  $region18: #{forward.1} parent=0 // pred_check
    _
  $region19: #{forward.1} parent=0 // pred_check_branch
    %1476 = sbr.rel (0) target = $region21
  $region20: #{forward.1} parent=0 // pred_region
    _
  $region21: #{forward.1} parent=0 // pred_fallthru
    _

</llo_original>
